<compile_context>
chip_gen: v7x
topology: tpu7x:2x2x1
jax: 0.10.0
libtpu: 0.0.40
codegen_flags: <defaults>
</compile_context>

<pallas_src>
import jax
import jax.numpy as jnp
from jax.experimental import pallas as pl
from jax.experimental.pallas import tpu as pltpu

BN_EPS = 1e-5   # PyTorch BatchNorm1d default eps
LANE = 128      # TPU lane width; every feature axis is padded to a multiple of
                # this (use 256 on v6e/v7x for full 2x256x256 MXU tiles).


def _ceil_to(n, m):
    return ((n + m - 1) // m) * m


# ----------------------------- kernel helpers ------------------------------

def _softplus(x):
    # matches F.softplus(beta=1, threshold=20)
    return jnp.where(x > 20.0, x, jnp.log1p(jnp.exp(jnp.minimum(x, 20.0))))


def _fc_bn_relu(h, w_ref, b_ref, g_ref, beta_ref, compute_dtype):
    """Linear -> BatchNorm1d (training mode, biased batch stats) -> ReLU.

    BN statistics use the one-pass form E[y^2] - E[y]^2, so the [B, N] f32
    activation tensor is only swept once.  rsqrt goes to the EUP; the whole
    epilogue stays in f32 (v5e has no bf16 VPU/EUP path) and only the ReLU
    result is cast back to compute_dtype for the next MXU matmul.  Padded
    columns (W=0, b=0, gamma=1, beta=0) stay exactly 0 through BN + ReLU.
    """
    y = jnp.dot(h, w_ref[...], preferred_element_type=jnp.float32) + b_ref[...]
    mean = jnp.mean(y, axis=0, keepdims=True)
    mean_sq = jnp.mean(y * y, axis=0, keepdims=True)
    var = jnp.maximum(mean_sq - mean * mean, 0.0)       # biased var (1/N)
    scale = g_ref[...] * jax.lax.rsqrt(var + BN_EPS)    # EUP rsqrt, one mul
    y = (y - mean) * scale + beta_ref[...]
    return jnp.maximum(y, 0.0).astype(compute_dtype)


def _make_vae_kernel(n_inf_blocks, n_gen_blocks, latent, head_pad,
                     compute_dtype):
    """Full VAE forward in one fused pass (whole batch resident in VMEM).

    Ref order:
      x_pad, eps_pad,
      <inference hidden blocks: (W, b, gamma, beta) x n_inf_blocks>,
      W_head, b_head,                                   # merged (mu | std) head
      <generative hidden blocks: (W, b, gamma, beta) x n_gen_blocks>,
      W_out, b_out,
      recon_out, head_out
    All matmul weights are stored [in, out], pre-padded to LANE multiples and
    pre-cast to compute_dtype.  Both outputs are lane-dense (unmasked stores).
    """

    def kernel(*refs):
        it = iter(refs)
        x_ref = next(it)
        eps_ref = next(it)

        # ---------------- inference net ----------------
        h = x_ref[...].astype(compute_dtype)
        for _ in range(n_inf_blocks):
            h = _fc_bn_relu(h, next(it), next(it), next(it), next(it),
                            compute_dtype)

        # Merged head: one lane-dense [nodes, head_pad] matmul instead of two
        # tiny latent-wide matmuls.  Lanes [0, latent) hold mu, lanes
        # [latent, 2*latent) hold the pre-softplus std logits.
        w_head_ref, b_head_ref = next(it), next(it)
        z_head = (jnp.dot(h, w_head_ref[...],
                          preferred_element_type=jnp.float32) + b_head_ref[...])
        col = jax.lax.broadcasted_iota(jnp.int32, z_head.shape, 1)
        # head = [ mu | softplus(std logits) | softplus(0) padding ]; one
        # unmasked 128-lane-multiple store, wrapper slices mu / std from it.
        head = jnp.where(col < latent, z_head, _softplus(z_head))

        # Reparameterization: align softplus(std) lanes with the mu lanes via
        # an XLU lane rotation (free slot), then z = mu + eps * std.  eps_pad
        # is zero outside [0, latent) and the first generative weight has zero
        # rows outside [0, latent), so padded lanes never contribute.
        std_aligned = pltpu.roll(head, shift=head_pad - latent, axis=1)
        z_sample = (z_head + eps_ref[...] * std_aligned).astype(compute_dtype)

        # ---------------- generative net ----------------
        g = z_sample
        for _ in range(n_gen_blocks):
            g = _fc_bn_relu(g, next(it), next(it), next(it), next(it),
                            compute_dtype)
        w_out_ref, b_out_ref = next(it), next(it)
        recon = (jnp.dot(g, w_out_ref[...],
                         preferred_element_type=jnp.float32) + b_out_ref[...])

        recon_ref = next(it)
        head_ref = next(it)
        recon_ref[...] = recon      # [B, out_pad]  lane-dense
        head_ref[...] = head        # [B, head_pad] lane-dense

    return kernel


# ----------------------------- wrapper --------------------------------------

def _pad_cols(a, target, value=0.0):
    pad = target - a.shape[1]
    if pad == 0:
        return a
    return jnp.pad(a, ((0, 0), (0, pad)), constant_values=value)


def _pad_rows(a, target):
    pad = target - a.shape[0]
    if pad == 0:
        return a
    return jnp.pad(a, ((0, pad), (0, 0)))


def vae_forward(x, eps, inf_params, gen_params, latent_dim,
                compute_dtype=jnp.bfloat16):
    """Fused VAE forward.  Returns (recon_logits, mu_z, std_z), matching
    VAE.forward() of the PyTorch module (training-mode BatchNorm, raw decoder
    logits, reparam noise `eps` supplied explicitly).

    compute_dtype controls the MXU input dtype (bf16 default; f32 recovers
    exact PyTorch f32 semantics).  Accumulation is always f32."""
    B, op_dim = x.shape
    out_dim = gen_params[-1].shape[1]
    n_inf_blocks = (len(inf_params) - 2) // 4
    n_gen_blocks = (len(gen_params) - 2) // 4

    op_dim_pad = _ceil_to(op_dim, LANE)
    out_pad = _ceil_to(out_dim, LANE)
    head_pad = _ceil_to(2 * latent_dim, LANE)

    flat = []
    flops = 0
    trans = 0
    widths = [op_dim_pad, head_pad, out_pad]

    # Padding invariant (correctness): padded columns keep weight=0, bias=0,
    # gamma=1, beta=0, so BN maps them to exactly 0 (var=0 -> finite scale)
    # and real-column batch statistics are unchanged; padded rows are 0 so
    # they ignore the (zero) padded activations of the previous layer.
    def add_block(w, b, gm, be, in_pad, n_pad):
        nonlocal flops, trans
        wp = _pad_cols(_pad_rows(w, in_pad), n_pad).astype(compute_dtype)
        bp = _pad_cols(b, n_pad)                  # padded bias = 0
        gp = _pad_cols(gm, n_pad, value=1.0)      # padded gamma = 1
        ep = _pad_cols(be, n_pad)                 # padded beta = 0
        assert wp.shape == (in_pad, n_pad)
        assert bp.shape == gp.shape == ep.shape == (1, n_pad)
        flat.extend([wp, bp, gp, ep])
        flops += 2 * B * in_pad * n_pad
        trans += n_pad                            # one rsqrt per BN column

    def add_linear(w, b, in_pad, n_pad):
        nonlocal flops
        wp = _pad_cols(_pad_rows(w, in_pad), n_pad).astype(compute_dtype)
        bp = _pad_cols(b, n_pad)
        assert wp.shape == (in_pad, n_pad) and bp.shape == (1, n_pad)
        flat.extend([wp, bp])
        flops += 2 * B * in_pad * n_pad

    # Inference hidden blocks.
    in_pad = op_dim_pad
    for i in range(n_inf_blocks):
        w, b, gm, be = inf_params[4 * i: 4 * i + 4]
        n_pad = _ceil_to(w.shape[1], LANE)
        widths.append(n_pad)
        add_block(w, b, gm, be, in_pad, n_pad)
        in_pad = n_pad
    # Merged (mu | std) head, padded to a single lane-dense block.
    add_linear(inf_params[-2], inf_params[-1], in_pad, head_pad)
    trans += B * head_pad                         # softplus

    # Generative hidden blocks; the first one consumes the head_pad-wide z
    # (zero rows beyond latent_dim kill the padded lanes of z_sample).
    in_pad = head_pad
    for i in range(n_gen_blocks):
        w, b, gm, be = gen_params[4 * i: 4 * i + 4]
        n_pad = _ceil_to(w.shape[1], LANE)
        widths.append(n_pad)
        add_block(w, b, gm, be, in_pad, n_pad)
        in_pad = n_pad
    add_linear(gen_params[-2], gen_params[-1], in_pad, out_pad)

    # Lane-dense inputs: pad x to op_dim_pad, eps to head_pad (zeros outside
    # [0, latent_dim) so the reparam ignores padded lanes).
    x_pad = _pad_cols(x, op_dim_pad)
    eps_pad = _pad_cols(eps, head_pad)

    # Advisory cost estimate for XLA scheduling.
    out_bytes = 4 * B * (out_pad + head_pad)
    in_bytes = (x_pad.size * x_pad.dtype.itemsize
                + eps_pad.size * eps_pad.dtype.itemsize
                + sum(int(p.size) * p.dtype.itemsize for p in flat))
    cost = pl.CostEstimate(flops=int(flops), transcendentals=int(trans),
                           bytes_accessed=int(in_bytes + out_bytes))

    # Scoped-VMEM budget: everything is resident (no grid), so size the limit
    # from the footprint + a few live f32 activation slabs, 2x headroom,
    # capped at 64 MiB so the same setting is legal on v7x.
    act_bytes = 6 * B * max(widths) * 4
    vmem_limit = int(min(max(2 * (in_bytes + out_bytes + act_bytes), 16 << 20),
                         64 << 20))

    kernel = _make_vae_kernel(n_inf_blocks, n_gen_blocks, latent_dim, head_pad,
                              compute_dtype)
    vmem = pl.BlockSpec(memory_space=pltpu.MemorySpace.VMEM)
    out_shape = (
        jax.ShapeDtypeStruct((B, out_pad), jnp.float32),
        jax.ShapeDtypeStruct((B, head_pad), jnp.float32),
    )
    recon_p, head_p = pl.pallas_call(
        kernel,
        out_shape=out_shape,
        in_specs=[vmem] * (2 + len(flat)),
        out_specs=(vmem, vmem),
        compiler_params=pltpu.CompilerParams(vmem_limit_bytes=vmem_limit),
        cost_estimate=cost,
    )(x_pad, eps_pad, *flat)

    # Static lane slices back to the module's unpadded interface.
    recon = recon_p[:, :out_dim]
    mu_z = head_p[:, :latent_dim]
    std_z = head_p[:, latent_dim:2 * latent_dim]
    return recon, mu_z, std_z


# ------------------------- parameter initialization -------------------------

def init_fcnet_params(key, ip_dim, op_dim, num_nodes, num_layers):
    """FCNet params: num_layers blocks of (Linear, BN) then a final Linear.
    Linear init mimics PyTorch: U(-1/sqrt(fan_in), 1/sqrt(fan_in)).
    Weights stored [in, out]; per-feature vectors stored [1, out]."""
    params = []
    fan_ins = [ip_dim] + [num_nodes] * (num_layers - 1)
    for d_in in fan_ins:
        key, k1, k2 = jax.random.split(key, 3)
        bound = 1.0 / (d_in ** 0.5)
        w = jax.random.uniform(k1, (d_in, num_nodes), jnp.float32, -bound, bound)
        b = jax.random.uniform(k2, (1, num_nodes), jnp.float32, -bound, bound)
        gamma = jnp.ones((1, num_nodes), jnp.float32)
        beta = jnp.zeros((1, num_nodes), jnp.float32)
        params += [w, b, gamma, beta]
    key, k1, k2 = jax.random.split(key, 3)
    bound = 1.0 / (num_nodes ** 0.5)
    w = jax.random.uniform(k1, (num_nodes, op_dim), jnp.float32, -bound, bound)
    b = jax.random.uniform(k2, (1, op_dim), jnp.float32, -bound, bound)
    params += [w, b]
    return params, key


# --------------------------- pure-JAX reference ------------------------------

def _ref_fcnet(x, params, compute_dtype):
    n_blocks = (len(params) - 2) // 4
    h = x
    i = 0
    for _ in range(n_blocks):
        w, b, g, be = params[i:i + 4]
        i += 4
        y = jnp.dot(h.astype(compute_dtype), w.astype(compute_dtype),
                    preferred_element_type=jnp.float32) + b
        mean = jnp.mean(y, axis=0, keepdims=True)
        var = jnp.maximum(jnp.mean(y * y, axis=0, keepdims=True) - mean * mean,
                          0.0)
        y = (y - mean) * (g * jax.lax.rsqrt(var + BN_EPS)) + be
        h = jnp.maximum(y, 0.0)
    w, b = params[i], params[i + 1]
    return jnp.dot(h.astype(compute_dtype), w.astype(compute_dtype),
                   preferred_element_type=jnp.float32) + b


def _ref_vae(x, eps, inf_params, gen_params, latent_dim, compute_dtype):
    # Unpadded reference: merged-head + lane padding in the kernel must
    # reproduce exactly this (padding only adds exact zeros).
    z = _ref_fcnet(x, inf_params, compute_dtype)
    mu_z = z[:, :latent_dim]
    std_z = _softplus(z[:, latent_dim:])
    z_sample = mu_z + eps * std_z
    recon = _ref_fcnet(z_sample, gen_params, compute_dtype)
    return recon, mu_z, std_z


# --------------------------------- main --------------------------------------

if __name__ == "__main__":
    # Small, module-consistent config:
    B = 8            # batch
    OP_DIM = 64      # flattened image dim (e.g. 8x8)
    NUM_NODES = 32   # FCNet hidden width
    LATENT = 8       # latent_dim
    NUM_INFERENCE_LAYERS = 2
    NUM_GEN_LAYERS = 2

    key = jax.random.PRNGKey(0)
    key, kx, keps = jax.random.split(key, 3)
    x = jax.random.uniform(kx, (B, OP_DIM), jnp.float32)      # "image" in [0, 1]
    eps = jax.random.normal(keps, (B, LATENT), jnp.float32)   # reparam noise
    # TODO(synk): torch draws reparam eps inside forward(); here it is supplied
    # deterministically as a kernel input.

    inf_params, key = init_fcnet_params(
        key, ip_dim=OP_DIM, op_dim=2 * LATENT,
        num_nodes=NUM_NODES, num_layers=NUM_INFERENCE_LAYERS)
    gen_params, key = init_fcnet_params(
        key, ip_dim=LATENT, op_dim=OP_DIM,
        num_nodes=NUM_NODES, num_layers=NUM_GEN_LAYERS)

    # ---- fast path: bf16 MXU inputs, f32 accumulation (default) ----
    recon, mu_z, std_z = vae_forward(x, eps, inf_params, gen_params, LATENT,
                                     compute_dtype=jnp.bfloat16)
    jax.block_until_ready((recon, mu_z, std_z))
    recon_ref, mu_ref, std_ref = _ref_vae(x, eps, inf_params, gen_params,
                                          LATENT, compute_dtype=jnp.bfloat16)
    assert recon.shape == (B, OP_DIM)
    assert mu_z.shape == (B, LATENT) and std_z.shape == (B, LATENT)
    assert jnp.allclose(recon, recon_ref, rtol=5e-3, atol=5e-3)
    assert jnp.allclose(mu_z, mu_ref, rtol=5e-3, atol=5e-3)
    assert jnp.allclose(std_z, std_ref, rtol=5e-3, atol=5e-3)

    # ---- exact PyTorch f32 semantics path ----
    recon32, mu32, std32 = vae_forward(x, eps, inf_params, gen_params, LATENT,
                                       compute_dtype=jnp.float32)
    jax.block_until_ready((recon32, mu32, std32))
    recon_r32, mu_r32, std_r32 = _ref_vae(x, eps, inf_params, gen_params,
                                          LATENT, compute_dtype=jnp.float32)
    assert jnp.allclose(recon32, recon_r32, rtol=1e-3, atol=1e-3)
    assert jnp.allclose(mu32, mu_r32, rtol=1e-3, atol=1e-3)
    assert jnp.allclose(std32, std_r32, rtol=1e-3, atol=1e-3)

    print("KERNEL_OK")
</pallas_src>

<mosaic_0001>
module attributes {stable_mosaic.version = 11 : i64} {
  func.func @kernel(%arg0: memref<8x128xf32, #tpu.memory_space<vmem>>, %arg1: memref<8x128xf32, #tpu.memory_space<vmem>>, %arg2: memref<128x128xbf16, #tpu.memory_space<vmem>>, %arg3: memref<1x128xf32, #tpu.memory_space<vmem>>, %arg4: memref<1x128xf32, #tpu.memory_space<vmem>>, %arg5: memref<1x128xf32, #tpu.memory_space<vmem>>, %arg6: memref<128x128xbf16, #tpu.memory_space<vmem>>, %arg7: memref<1x128xf32, #tpu.memory_space<vmem>>, %arg8: memref<1x128xf32, #tpu.memory_space<vmem>>, %arg9: memref<1x128xf32, #tpu.memory_space<vmem>>, %arg10: memref<128x128xbf16, #tpu.memory_space<vmem>>, %arg11: memref<1x128xf32, #tpu.memory_space<vmem>>, %arg12: memref<128x128xbf16, #tpu.memory_space<vmem>>, %arg13: memref<1x128xf32, #tpu.memory_space<vmem>>, %arg14: memref<1x128xf32, #tpu.memory_space<vmem>>, %arg15: memref<1x128xf32, #tpu.memory_space<vmem>>, %arg16: memref<128x128xbf16, #tpu.memory_space<vmem>>, %arg17: memref<1x128xf32, #tpu.memory_space<vmem>>, %arg18: memref<1x128xf32, #tpu.memory_space<vmem>>, %arg19: memref<1x128xf32, #tpu.memory_space<vmem>>, %arg20: memref<128x128xbf16, #tpu.memory_space<vmem>>, %arg21: memref<1x128xf32, #tpu.memory_space<vmem>>, %arg22: memref<8x128xf32, #tpu.memory_space<vmem>>, %arg23: memref<8x128xf32, #tpu.memory_space<vmem>>) attributes {dimension_semantics = [], scalar_prefetch = 0 : i64, scratch_operands = 0 : i64, tpu.core_type = #tpu.core_type<tc>} {
    %c0 = arith.constant 0 : index
    %c0_0 = arith.constant 0 : index
    %0 = vector.load %arg0[%c0, %c0_0] : memref<8x128xf32, #tpu.memory_space<vmem>>, vector<8x128xf32>
    %1 = arith.truncf %0 : vector<8x128xf32> to vector<8x128xbf16>
    %c0_1 = arith.constant 0 : index
    %c0_2 = arith.constant 0 : index
    %2 = vector.load %arg2[%c0_1, %c0_2] : memref<128x128xbf16, #tpu.memory_space<vmem>>, vector<128x128xbf16>
    %cst = arith.constant dense<0.000000e+00> : vector<8x128xf32>
    %3 = tpu.matmul %1, %2, %cst {dimension_numbers = #tpu.dot_dimension_numbers<[1], [0], [0], [1], [0, 0, 1, 1], [], []>} : vector<8x128xbf16>, vector<128x128xbf16>, vector<8x128xf32> -> vector<8x128xf32>
    %c0_3 = arith.constant 0 : index
    %c0_4 = arith.constant 0 : index
    %4 = vector.load %arg3[%c0_3, %c0_4] : memref<1x128xf32, #tpu.memory_space<vmem>>, vector<1x128xf32>
    %5 = vector.broadcast %4 : vector<1x128xf32> to vector<8x128xf32>
    %6 = arith.addf %3, %5 : vector<8x128xf32>
    %cst_5 = arith.constant dense<0.000000e+00> : vector<128xf32>
    %7 = vector.multi_reduction <add>, %6, %cst_5 [0] : vector<8x128xf32> to vector<128xf32>
    %8 = vector.shape_cast %7 : vector<128xf32> to vector<1x128xf32>
    %cst_6 = arith.constant 8.000000e+00 : f32
    %9 = vector.broadcast %cst_6 : f32 to vector<1x128xf32>
    %10 = arith.divf %8, %9 : vector<1x128xf32>
    %11 = arith.mulf %6, %6 : vector<8x128xf32>
    %cst_7 = arith.constant dense<0.000000e+00> : vector<128xf32>
    %12 = vector.multi_reduction <add>, %11, %cst_7 [0] : vector<8x128xf32> to vector<128xf32>
    %13 = vector.shape_cast %12 : vector<128xf32> to vector<1x128xf32>
    %cst_8 = arith.constant 8.000000e+00 : f32
    %14 = vector.broadcast %cst_8 : f32 to vector<1x128xf32>
    %15 = arith.divf %13, %14 : vector<1x128xf32>
    %16 = arith.mulf %10, %10 : vector<1x128xf32>
    %17 = arith.subf %15, %16 : vector<1x128xf32>
    %cst_9 = arith.constant 0.000000e+00 : f32
    %18 = vector.broadcast %cst_9 : f32 to vector<1x128xf32>
    %19 = arith.maximumf %17, %18 : vector<1x128xf32>
    %c0_10 = arith.constant 0 : index
    %c0_11 = arith.constant 0 : index
    %20 = vector.load %arg4[%c0_10, %c0_11] : memref<1x128xf32, #tpu.memory_space<vmem>>, vector<1x128xf32>
    %cst_12 = arith.constant 9.99999974E-6 : f32
    %21 = vector.broadcast %cst_12 : f32 to vector<1x128xf32>
    %22 = arith.addf %19, %21 : vector<1x128xf32>
    %23 = math.rsqrt %22 : vector<1x128xf32>
    %24 = arith.mulf %20, %23 : vector<1x128xf32>
    %25 = vector.broadcast %10 : vector<1x128xf32> to vector<8x128xf32>
    %26 = arith.subf %6, %25 : vector<8x128xf32>
    %27 = vector.broadcast %24 : vector<1x128xf32> to vector<8x128xf32>
    %28 = arith.mulf %26, %27 : vector<8x128xf32>
    %c0_13 = arith.constant 0 : index
    %c0_14 = arith.constant 0 : index
    %29 = vector.load %arg5[%c0_13, %c0_14] : memref<1x128xf32, #tpu.memory_space<vmem>>, vector<1x128xf32>
    %30 = vector.broadcast %29 : vector<1x128xf32> to vector<8x128xf32>
    %31 = arith.addf %28, %30 : vector<8x128xf32>
    %cst_15 = arith.constant 0.000000e+00 : f32
    %32 = vector.broadcast %cst_15 : f32 to vector<8x128xf32>
    %33 = arith.maximumf %31, %32 : vector<8x128xf32>
    %34 = arith.truncf %33 : vector<8x128xf32> to vector<8x128xbf16>
    %c0_16 = arith.constant 0 : index
    %c0_17 = arith.constant 0 : index
    %35 = vector.load %arg6[%c0_16, %c0_17] : memref<128x128xbf16, #tpu.memory_space<vmem>>, vector<128x128xbf16>
    %cst_18 = arith.constant dense<0.000000e+00> : vector<8x128xf32>
    %36 = tpu.matmul %34, %35, %cst_18 {dimension_numbers = #tpu.dot_dimension_numbers<[1], [0], [0], [1], [0, 0, 1, 1], [], []>} : vector<8x128xbf16>, vector<128x128xbf16>, vector<8x128xf32> -> vector<8x128xf32>
    %c0_19 = arith.constant 0 : index
    %c0_20 = arith.constant 0 : index
    %37 = vector.load %arg7[%c0_19, %c0_20] : memref<1x128xf32, #tpu.memory_space<vmem>>, vector<1x128xf32>
    %38 = vector.broadcast %37 : vector<1x128xf32> to vector<8x128xf32>
    %39 = arith.addf %36, %38 : vector<8x128xf32>
    %cst_21 = arith.constant dense<0.000000e+00> : vector<128xf32>
    %40 = vector.multi_reduction <add>, %39, %cst_21 [0] : vector<8x128xf32> to vector<128xf32>
    %41 = vector.shape_cast %40 : vector<128xf32> to vector<1x128xf32>
    %cst_22 = arith.constant 8.000000e+00 : f32
    %42 = vector.broadcast %cst_22 : f32 to vector<1x128xf32>
    %43 = arith.divf %41, %42 : vector<1x128xf32>
    %44 = arith.mulf %39, %39 : vector<8x128xf32>
    %cst_23 = arith.constant dense<0.000000e+00> : vector<128xf32>
    %45 = vector.multi_reduction <add>, %44, %cst_23 [0] : vector<8x128xf32> to vector<128xf32>
    %46 = vector.shape_cast %45 : vector<128xf32> to vector<1x128xf32>
    %cst_24 = arith.constant 8.000000e+00 : f32
    %47 = vector.broadcast %cst_24 : f32 to vector<1x128xf32>
    %48 = arith.divf %46, %47 : vector<1x128xf32>
    %49 = arith.mulf %43, %43 : vector<1x128xf32>
    %50 = arith.subf %48, %49 : vector<1x128xf32>
    %cst_25 = arith.constant 0.000000e+00 : f32
    %51 = vector.broadcast %cst_25 : f32 to vector<1x128xf32>
    %52 = arith.maximumf %50, %51 : vector<1x128xf32>
    %c0_26 = arith.constant 0 : index
    %c0_27 = arith.constant 0 : index
    %53 = vector.load %arg8[%c0_26, %c0_27] : memref<1x128xf32, #tpu.memory_space<vmem>>, vector<1x128xf32>
    %cst_28 = arith.constant 9.99999974E-6 : f32
    %54 = vector.broadcast %cst_28 : f32 to vector<1x128xf32>
    %55 = arith.addf %52, %54 : vector<1x128xf32>
    %56 = math.rsqrt %55 : vector<1x128xf32>
    %57 = arith.mulf %53, %56 : vector<1x128xf32>
    %58 = vector.broadcast %43 : vector<1x128xf32> to vector<8x128xf32>
    %59 = arith.subf %39, %58 : vector<8x128xf32>
    %60 = vector.broadcast %57 : vector<1x128xf32> to vector<8x128xf32>
    %61 = arith.mulf %59, %60 : vector<8x128xf32>
    %c0_29 = arith.constant 0 : index
    %c0_30 = arith.constant 0 : index
    %62 = vector.load %arg9[%c0_29, %c0_30] : memref<1x128xf32, #tpu.memory_space<vmem>>, vector<1x128xf32>
    %63 = vector.broadcast %62 : vector<1x128xf32> to vector<8x128xf32>
    %64 = arith.addf %61, %63 : vector<8x128xf32>
    %cst_31 = arith.constant 0.000000e+00 : f32
    %65 = vector.broadcast %cst_31 : f32 to vector<8x128xf32>
    %66 = arith.maximumf %64, %65 : vector<8x128xf32>
    %67 = arith.truncf %66 : vector<8x128xf32> to vector<8x128xbf16>
    %c0_32 = arith.constant 0 : index
    %c0_33 = arith.constant 0 : index
    %68 = vector.load %arg10[%c0_32, %c0_33] : memref<128x128xbf16, #tpu.memory_space<vmem>>, vector<128x128xbf16>
    %cst_34 = arith.constant dense<0.000000e+00> : vector<8x128xf32>
    %69 = tpu.matmul %67, %68, %cst_34 {dimension_numbers = #tpu.dot_dimension_numbers<[1], [0], [0], [1], [0, 0, 1, 1], [], []>} : vector<8x128xbf16>, vector<128x128xbf16>, vector<8x128xf32> -> vector<8x128xf32>
    %c0_35 = arith.constant 0 : index
    %c0_36 = arith.constant 0 : index
    %70 = vector.load %arg11[%c0_35, %c0_36] : memref<1x128xf32, #tpu.memory_space<vmem>>, vector<1x128xf32>
    %71 = vector.broadcast %70 : vector<1x128xf32> to vector<8x128xf32>
    %72 = arith.addf %69, %71 : vector<8x128xf32>
    %73 = tpu.iota {dimensions = array<i32: 1>} : vector<8x128xi32>
    %c8_i32 = arith.constant 8 : i32
    %74 = vector.broadcast %c8_i32 : i32 to vector<8x128xi32>
    %75 = arith.cmpi slt, %73, %74 : vector<8x128xi32>
    %cst_37 = arith.constant 2.000000e+01 : f32
    %76 = vector.broadcast %cst_37 : f32 to vector<8x128xf32>
    %77 = arith.cmpf ogt, %72, %76 : vector<8x128xf32>
    %cst_38 = arith.constant 2.000000e+01 : f32
    %78 = vector.broadcast %cst_38 : f32 to vector<8x128xf32>
    %79 = arith.minimumf %72, %78 : vector<8x128xf32>
    %80 = math.exp %79 : vector<8x128xf32>
    %81 = math.log1p %80 : vector<8x128xf32>
    %82 = arith.select %77, %72, %81 : vector<8x128xi1>, vector<8x128xf32>
    %83 = arith.select %75, %72, %82 : vector<8x128xi1>, vector<8x128xf32>
    %c120_i32 = arith.constant 120 : i32
    %84 = tpu.dynamic_rotate %83 by %c120_i32 dim 1 : vector<8x128xf32>, i32 -> vector<8x128xf32>
    %c0_39 = arith.constant 0 : index
    %c0_40 = arith.constant 0 : index
    %85 = vector.load %arg1[%c0_39, %c0_40] : memref<8x128xf32, #tpu.memory_space<vmem>>, vector<8x128xf32>
    %86 = arith.mulf %85, %84 : vector<8x128xf32>
    %87 = arith.addf %72, %86 : vector<8x128xf32>
    %88 = arith.truncf %87 : vector<8x128xf32> to vector<8x128xbf16>
    %c0_41 = arith.constant 0 : index
    %c0_42 = arith.constant 0 : index
    %89 = vector.load %arg12[%c0_41, %c0_42] : memref<128x128xbf16, #tpu.memory_space<vmem>>, vector<128x128xbf16>
    %cst_43 = arith.constant dense<0.000000e+00> : vector<8x128xf32>
    %90 = tpu.matmul %88, %89, %cst_43 {dimension_numbers = #tpu.dot_dimension_numbers<[1], [0], [0], [1], [0, 0, 1, 1], [], []>} : vector<8x128xbf16>, vector<128x128xbf16>, vector<8x128xf32> -> vector<8x128xf32>
    %c0_44 = arith.constant 0 : index
    %c0_45 = arith.constant 0 : index
    %91 = vector.load %arg13[%c0_44, %c0_45] : memref<1x128xf32, #tpu.memory_space<vmem>>, vector<1x128xf32>
    %92 = vector.broadcast %91 : vector<1x128xf32> to vector<8x128xf32>
    %93 = arith.addf %90, %92 : vector<8x128xf32>
    %cst_46 = arith.constant dense<0.000000e+00> : vector<128xf32>
    %94 = vector.multi_reduction <add>, %93, %cst_46 [0] : vector<8x128xf32> to vector<128xf32>
    %95 = vector.shape_cast %94 : vector<128xf32> to vector<1x128xf32>
    %cst_47 = arith.constant 8.000000e+00 : f32
    %96 = vector.broadcast %cst_47 : f32 to vector<1x128xf32>
    %97 = arith.divf %95, %96 : vector<1x128xf32>
    %98 = arith.mulf %93, %93 : vector<8x128xf32>
    %cst_48 = arith.constant dense<0.000000e+00> : vector<128xf32>
    %99 = vector.multi_reduction <add>, %98, %cst_48 [0] : vector<8x128xf32> to vector<128xf32>
    %100 = vector.shape_cast %99 : vector<128xf32> to vector<1x128xf32>
    %cst_49 = arith.constant 8.000000e+00 : f32
    %101 = vector.broadcast %cst_49 : f32 to vector<1x128xf32>
    %102 = arith.divf %100, %101 : vector<1x128xf32>
    %103 = arith.mulf %97, %97 : vector<1x128xf32>
    %104 = arith.subf %102, %103 : vector<1x128xf32>
    %cst_50 = arith.constant 0.000000e+00 : f32
    %105 = vector.broadcast %cst_50 : f32 to vector<1x128xf32>
    %106 = arith.maximumf %104, %105 : vector<1x128xf32>
    %c0_51 = arith.constant 0 : index
    %c0_52 = arith.constant 0 : index
    %107 = vector.load %arg14[%c0_51, %c0_52] : memref<1x128xf32, #tpu.memory_space<vmem>>, vector<1x128xf32>
    %cst_53 = arith.constant 9.99999974E-6 : f32
    %108 = vector.broadcast %cst_53 : f32 to vector<1x128xf32>
    %109 = arith.addf %106, %108 : vector<1x128xf32>
    %110 = math.rsqrt %109 : vector<1x128xf32>
    %111 = arith.mulf %107, %110 : vector<1x128xf32>
    %112 = vector.broadcast %97 : vector<1x128xf32> to vector<8x128xf32>
    %113 = arith.subf %93, %112 : vector<8x128xf32>
    %114 = vector.broadcast %111 : vector<1x128xf32> to vector<8x128xf32>
    %115 = arith.mulf %113, %114 : vector<8x128xf32>
    %c0_54 = arith.constant 0 : index
    %c0_55 = arith.constant 0 : index
    %116 = vector.load %arg15[%c0_54, %c0_55] : memref<1x128xf32, #tpu.memory_space<vmem>>, vector<1x128xf32>
    %117 = vector.broadcast %116 : vector<1x128xf32> to vector<8x128xf32>
    %118 = arith.addf %115, %117 : vector<8x128xf32>
    %cst_56 = arith.constant 0.000000e+00 : f32
    %119 = vector.broadcast %cst_56 : f32 to vector<8x128xf32>
    %120 = arith.maximumf %118, %119 : vector<8x128xf32>
    %121 = arith.truncf %120 : vector<8x128xf32> to vector<8x128xbf16>
    %c0_57 = arith.constant 0 : index
    %c0_58 = arith.constant 0 : index
    %122 = vector.load %arg16[%c0_57, %c0_58] : memref<128x128xbf16, #tpu.memory_space<vmem>>, vector<128x128xbf16>
    %cst_59 = arith.constant dense<0.000000e+00> : vector<8x128xf32>
    %123 = tpu.matmul %121, %122, %cst_59 {dimension_numbers = #tpu.dot_dimension_numbers<[1], [0], [0], [1], [0, 0, 1, 1], [], []>} : vector<8x128xbf16>, vector<128x128xbf16>, vector<8x128xf32> -> vector<8x128xf32>
    %c0_60 = arith.constant 0 : index
    %c0_61 = arith.constant 0 : index
    %124 = vector.load %arg17[%c0_60, %c0_61] : memref<1x128xf32, #tpu.memory_space<vmem>>, vector<1x128xf32>
    %125 = vector.broadcast %124 : vector<1x128xf32> to vector<8x128xf32>
    %126 = arith.addf %123, %125 : vector<8x128xf32>
    %cst_62 = arith.constant dense<0.000000e+00> : vector<128xf32>
    %127 = vector.multi_reduction <add>, %126, %cst_62 [0] : vector<8x128xf32> to vector<128xf32>
    %128 = vector.shape_cast %127 : vector<128xf32> to vector<1x128xf32>
    %cst_63 = arith.constant 8.000000e+00 : f32
    %129 = vector.broadcast %cst_63 : f32 to vector<1x128xf32>
    %130 = arith.divf %128, %129 : vector<1x128xf32>
    %131 = arith.mulf %126, %126 : vector<8x128xf32>
    %cst_64 = arith.constant dense<0.000000e+00> : vector<128xf32>
    %132 = vector.multi_reduction <add>, %131, %cst_64 [0] : vector<8x128xf32> to vector<128xf32>
    %133 = vector.shape_cast %132 : vector<128xf32> to vector<1x128xf32>
    %cst_65 = arith.constant 8.000000e+00 : f32
    %134 = vector.broadcast %cst_65 : f32 to vector<1x128xf32>
    %135 = arith.divf %133, %134 : vector<1x128xf32>
    %136 = arith.mulf %130, %130 : vector<1x128xf32>
    %137 = arith.subf %135, %136 : vector<1x128xf32>
    %cst_66 = arith.constant 0.000000e+00 : f32
    %138 = vector.broadcast %cst_66 : f32 to vector<1x128xf32>
    %139 = arith.maximumf %137, %138 : vector<1x128xf32>
    %c0_67 = arith.constant 0 : index
    %c0_68 = arith.constant 0 : index
    %140 = vector.load %arg18[%c0_67, %c0_68] : memref<1x128xf32, #tpu.memory_space<vmem>>, vector<1x128xf32>
    %cst_69 = arith.constant 9.99999974E-6 : f32
    %141 = vector.broadcast %cst_69 : f32 to vector<1x128xf32>
    %142 = arith.addf %139, %141 : vector<1x128xf32>
    %143 = math.rsqrt %142 : vector<1x128xf32>
    %144 = arith.mulf %140, %143 : vector<1x128xf32>
    %145 = vector.broadcast %130 : vector<1x128xf32> to vector<8x128xf32>
    %146 = arith.subf %126, %145 : vector<8x128xf32>
    %147 = vector.broadcast %144 : vector<1x128xf32> to vector<8x128xf32>
    %148 = arith.mulf %146, %147 : vector<8x128xf32>
    %c0_70 = arith.constant 0 : index
    %c0_71 = arith.constant 0 : index
    %149 = vector.load %arg19[%c0_70, %c0_71] : memref<1x128xf32, #tpu.memory_space<vmem>>, vector<1x128xf32>
    %150 = vector.broadcast %149 : vector<1x128xf32> to vector<8x128xf32>
    %151 = arith.addf %148, %150 : vector<8x128xf32>
    %cst_72 = arith.constant 0.000000e+00 : f32
    %152 = vector.broadcast %cst_72 : f32 to vector<8x128xf32>
    %153 = arith.maximumf %151, %152 : vector<8x128xf32>
    %154 = arith.truncf %153 : vector<8x128xf32> to vector<8x128xbf16>
    %c0_73 = arith.constant 0 : index
    %c0_74 = arith.constant 0 : index
    %155 = vector.load %arg20[%c0_73, %c0_74] : memref<128x128xbf16, #tpu.memory_space<vmem>>, vector<128x128xbf16>
    %cst_75 = arith.constant dense<0.000000e+00> : vector<8x128xf32>
    %156 = tpu.matmul %154, %155, %cst_75 {dimension_numbers = #tpu.dot_dimension_numbers<[1], [0], [0], [1], [0, 0, 1, 1], [], []>} : vector<8x128xbf16>, vector<128x128xbf16>, vector<8x128xf32> -> vector<8x128xf32>
    %c0_76 = arith.constant 0 : index
    %c0_77 = arith.constant 0 : index
    %157 = vector.load %arg21[%c0_76, %c0_77] : memref<1x128xf32, #tpu.memory_space<vmem>>, vector<1x128xf32>
    %158 = vector.broadcast %157 : vector<1x128xf32> to vector<8x128xf32>
    %159 = arith.addf %156, %158 : vector<8x128xf32>
    %c0_78 = arith.constant 0 : index
    %c0_79 = arith.constant 0 : index
    %160 = vector.load %arg22[%c0_78, %c0_79] : memref<8x128xf32, #tpu.memory_space<vmem>>, vector<8x128xf32>
    tpu.vector_store %arg22[%c0_78, %c0_79], %159 {strides = array<i32>} : memref<8x128xf32, #tpu.memory_space<vmem>>, vector<8x128xf32>,
    %c0_80 = arith.constant 0 : index
    %c0_81 = arith.constant 0 : index
    %161 = vector.load %arg23[%c0_80, %c0_81] : memref<8x128xf32, #tpu.memory_space<vmem>>, vector<8x128xf32>
    tpu.vector_store %arg23[%c0_80, %c0_81], %83 {strides = array<i32>} : memref<8x128xf32, #tpu.memory_space<vmem>>, vector<8x128xf32>,
    return
  }
}

</mosaic_0001>

<llo_original>
// kernel: tpu_custom_call.1
$region0: #{tpu_custom_call.1}
  #allocation0 [shape = 'u32[]', space=smem, size = 0x4, offset = 0x4, fixed_abs, tag = 'smem constant byte address 0x4 - core index']
  #allocation1 [shape = 'u32[144,128]{1,0:T(1,128)}', space=vmem, size = 0x12000, scoped, tag = 'internal scratch']
  %s0 = inlined_call_operand.hbm [shape: f32[8,128], index: 0, kind: input, shape index: {}]
  %s1 = inlined_call_operand.hbm [shape: f32[8,128], index: 1, kind: input, shape index: {}]
  %s2 = inlined_call_operand.hbm [shape: bf16[128,128], index: 2, kind: input, shape index: {}]
  %s3 = inlined_call_operand.vmem [shape: f32[1,128], index: 3, kind: input, shape index: {}]
  %s4 = inlined_call_operand.vmem [shape: f32[1,128], index: 4, kind: input, shape index: {}]
  %s5 = inlined_call_operand.vmem [shape: f32[1,128], index: 5, kind: input, shape index: {}]
  %s6 = inlined_call_operand.hbm [shape: bf16[128,128], index: 6, kind: input, shape index: {}]
  %s7 = inlined_call_operand.vmem [shape: f32[1,128], index: 7, kind: input, shape index: {}]
  %s8 = inlined_call_operand.vmem [shape: f32[1,128], index: 8, kind: input, shape index: {}]
  %s9 = inlined_call_operand.vmem [shape: f32[1,128], index: 9, kind: input, shape index: {}]
  %s10 = inlined_call_operand.hbm [shape: bf16[128,128], index: 10, kind: input, shape index: {}]
  %s11 = inlined_call_operand.vmem [shape: f32[1,128], index: 11, kind: input, shape index: {}]
  %s12 = inlined_call_operand.hbm [shape: bf16[128,128], index: 12, kind: input, shape index: {}]
  %s13 = inlined_call_operand.vmem [shape: f32[1,128], index: 13, kind: input, shape index: {}]
  %s14 = inlined_call_operand.vmem [shape: f32[1,128], index: 14, kind: input, shape index: {}]
  %s15 = inlined_call_operand.vmem [shape: f32[1,128], index: 15, kind: input, shape index: {}]
  %s16 = inlined_call_operand.hbm [shape: bf16[128,128], index: 16, kind: input, shape index: {}]
  %s17 = inlined_call_operand.vmem [shape: f32[1,128], index: 17, kind: input, shape index: {}]
  %s18 = inlined_call_operand.hbm [shape: f32[1,128], index: 18, kind: input, shape index: {}]
  %s19 = inlined_call_operand.hbm [shape: f32[1,128], index: 19, kind: input, shape index: {}]
  %s20 = inlined_call_operand.vmem [shape: bf16[128,128], index: 20, kind: input, shape index: {}]
  %s21 = inlined_call_operand.vmem [shape: f32[1,128], index: 21, kind: input, shape index: {}]
  %s22 = inlined_call_operand.hbm [shape: f32[8,128], index: 22, kind: output, shape index: {0}]
  %s23 = inlined_call_operand.hbm [shape: f32[8,128], index: 23, kind: output, shape index: {1}]
  %24 = xla_tuple %s22, %s23
  %s25 = sld [smem:[#allocation0]]
  $region142: #{tpu_custom_call.1} parent=0
    _
  %s27 = ssub.s32 1, %s25
  %s28 = scalar_select 0, %s27, %s25
  $region1: #{tpu_custom_call.1} parent=0
    #allocation2 [shape = 'u8[4096]{0}', space=vmem, size = 0x1000, scoped, tag = 'input window, operand 0, single buffered']
    #allocation3 [shape = 's32[1]{0}', space=sflag, size = 0x4, scoped, tag = 'scoped memory for tpu_custom_call.1']
    #allocation4 [shape = 's32[1]{0}', space=sflag, size = 0x4, scoped, tag = 'scoped memory for tpu_custom_call.1']
    #allocation5 [shape = 'u8[4096]{0}', space=vmem, size = 0x1000, scoped, tag = 'input window, operand 1, single buffered']
    #allocation6 [shape = 's32[1]{0}', space=sflag, size = 0x4, scoped, tag = 'scoped memory for tpu_custom_call.1']
    #allocation7 [shape = 'u8[32768]{0}', space=vmem, size = 0x8000, scoped, tag = 'input window, operand 2, single buffered']
    #allocation8 [shape = 'u8[32768]{0}', space=vmem, size = 0x8000, scoped, tag = 'input window, operand 6, single buffered']
    #allocation9 [shape = 's32[1]{0}', space=sflag, size = 0x4, scoped, tag = 'scoped memory for tpu_custom_call.1']
    #allocation10 [shape = 'u8[32768]{0}', space=vmem, size = 0x8000, scoped, tag = 'input window, operand 10, single buffered']
    #allocation11 [shape = 'u8[32768]{0}', space=vmem, size = 0x8000, scoped, tag = 'input window, operand 12, single buffered']
    #allocation12 [shape = 's32[1]{0}', space=sflag, size = 0x4, scoped, tag = 'scoped memory for tpu_custom_call.1']
    #allocation13 [shape = 'u8[32768]{0}', space=vmem, size = 0x8000, scoped, tag = 'input window, operand 16, single buffered']
    #allocation14 [shape = 'u8[512]{0}', space=vmem, size = 0x400, scoped, tag = 'input window, operand 18, single buffered']
    #allocation15 [shape = 's32[1]{0}', space=sflag, size = 0x4, scoped, tag = 'scoped memory for tpu_custom_call.1']
    #allocation16 [shape = 'u8[512]{0}', space=vmem, size = 0x400, scoped, tag = 'input window, operand 19, single buffered']
    #allocation17 [shape = 'u8[4096]{0}', space=vmem, size = 0x1000, scoped, tag = 'output window, operand 0, single buffered']
    #allocation18 [shape = 'u8[4096]{0}', space=vmem, size = 0x1000, scoped, tag = 'output window, operand 1, single buffered']
    #allocation19 [shape = 's32[1]{0}', space=sflag, size = 0x4, scoped, tag = 'scoped memory for tpu_custom_call.1']
    %29 = vsyncpa [#allocation3], 0
    %30 = vsyncpa [#allocation6], 0
    %31 = vsyncpa [#allocation9], 0
    %32 = vsyncpa [#allocation12], 0
    %33 = vsyncpa [#allocation15], 0
    %34 = vsyncpa [#allocation4], 0
    %35 = vsyncpa [#allocation19], 0
    // Predicated region
    $region2: #{tpu_custom_call.1} parent=1 // pred_check
      _
    $region3: #{tpu_custom_call.1} parent=1 // pred_check_branch
      %37 = sbr.rel (0) target = $region5
    $region4: #{tpu_custom_call.1} parent=1 // pred_region
      %s39 = ssub.s32 128, 128
      %40 = vsyncadd [#allocation3], %s39
      %s42 = sshll.u32 [#allocation2], 4
      %s43 = int_to_ptr.vmem [resolvable:$true] %s42
      %45 = dma.hbm_to_vmem [thread:$0]  %s0, 128, %s43, [#allocation3]
    $region5: #{tpu_custom_call.1} parent=1 // pred_fallthru
      _
    // Predicated region
    $region6: #{tpu_custom_call.1} parent=1 // pred_check
      _
    $region7: #{tpu_custom_call.1} parent=1 // pred_check_branch
      %47 = sbr.rel (0) target = $region9
    $region8: #{tpu_custom_call.1} parent=1 // pred_region
      %s49 = ssub.s32 128, 128
      %50 = vsyncadd [#allocation6], %s49
      %s52 = sshll.u32 [#allocation5], 4
      %s53 = int_to_ptr.vmem [resolvable:$true] %s52
      %55 = dma.hbm_to_vmem [thread:$0]  %s1, 128, %s53, [#allocation6]
    $region9: #{tpu_custom_call.1} parent=1 // pred_fallthru
      _
    // Predicated region
    $region10: #{tpu_custom_call.1} parent=1 // pred_check
      _
    $region11: #{tpu_custom_call.1} parent=1 // pred_check_branch
      %57 = sbr.rel (0) target = $region13
    $region12: #{tpu_custom_call.1} parent=1 // pred_region
      %s59 = ssub.s32 1024, 1024
      %60 = vsyncadd [#allocation6], %s59
      %s61 = sshll.u32 [#allocation7], 4
      %s62 = int_to_ptr.vmem [resolvable:$true] %s61
      %67 = dma.hbm_to_vmem [thread:$0]  %s2, 1024, %s62, [#allocation6], 64, 64, 4
    $region13: #{tpu_custom_call.1} parent=1 // pred_fallthru
      _
    // Predicated region
    $region14: #{tpu_custom_call.1} parent=1 // pred_check
      _
    $region15: #{tpu_custom_call.1} parent=1 // pred_check_branch
      %69 = sbr.rel (0) target = $region17
    $region16: #{tpu_custom_call.1} parent=1 // pred_region
      _
    $region17: #{tpu_custom_call.1} parent=1 // pred_fallthru
      _
    // Predicated region
    $region18: #{tpu_custom_call.1} parent=1 // pred_check
      _
    $region19: #{tpu_custom_call.1} parent=1 // pred_check_branch
      %71 = sbr.rel (0) target = $region21
    $region20: #{tpu_custom_call.1} parent=1 // pred_region
      _
    $region21: #{tpu_custom_call.1} parent=1 // pred_fallthru
      _
    // Predicated region
    $region22: #{tpu_custom_call.1} parent=1 // pred_check
      _
    $region23: #{tpu_custom_call.1} parent=1 // pred_check_branch
      %73 = sbr.rel (0) target = $region25
    $region24: #{tpu_custom_call.1} parent=1 // pred_region
      _
    $region25: #{tpu_custom_call.1} parent=1 // pred_fallthru
      _
    // Predicated region
    $region26: #{tpu_custom_call.1} parent=1 // pred_check
      _
    $region27: #{tpu_custom_call.1} parent=1 // pred_check_branch
      %75 = sbr.rel (0) target = $region29
    $region28: #{tpu_custom_call.1} parent=1 // pred_region
      %s77 = ssub.s32 1024, 1024
      %78 = vsyncadd [#allocation9], %s77
      %s79 = sshll.u32 [#allocation8], 4
      %s80 = int_to_ptr.vmem [resolvable:$true] %s79
      %85 = dma.hbm_to_vmem [thread:$0]  %s6, 1024, %s80, [#allocation9], 64, 64, 4
    $region29: #{tpu_custom_call.1} parent=1 // pred_fallthru
      _
    // Predicated region
    $region30: #{tpu_custom_call.1} parent=1 // pred_check
      _
    $region31: #{tpu_custom_call.1} parent=1 // pred_check_branch
      %87 = sbr.rel (0) target = $region33
    $region32: #{tpu_custom_call.1} parent=1 // pred_region
      _
    $region33: #{tpu_custom_call.1} parent=1 // pred_fallthru
      _
    // Predicated region
    $region34: #{tpu_custom_call.1} parent=1 // pred_check
      _
    $region35: #{tpu_custom_call.1} parent=1 // pred_check_branch
      %89 = sbr.rel (0) target = $region37
    $region36: #{tpu_custom_call.1} parent=1 // pred_region
      _
    $region37: #{tpu_custom_call.1} parent=1 // pred_fallthru
      _
    // Predicated region
    $region38: #{tpu_custom_call.1} parent=1 // pred_check
      _
    $region39: #{tpu_custom_call.1} parent=1 // pred_check_branch
      %91 = sbr.rel (0) target = $region41
    $region40: #{tpu_custom_call.1} parent=1 // pred_region
      _
    $region41: #{tpu_custom_call.1} parent=1 // pred_fallthru
      _
    // Predicated region
    $region42: #{tpu_custom_call.1} parent=1 // pred_check
      _
    $region43: #{tpu_custom_call.1} parent=1 // pred_check_branch
      %93 = sbr.rel (0) target = $region45
    $region44: #{tpu_custom_call.1} parent=1 // pred_region
      %s95 = ssub.s32 1024, 1024
      %96 = vsyncadd [#allocation9], %s95
      %s97 = sshll.u32 [#allocation10], 4
      %s98 = int_to_ptr.vmem [resolvable:$true] %s97
      %103 = dma.hbm_to_vmem [thread:$0]  %s10, 1024, %s98, [#allocation9], 64, 64, 4
    $region45: #{tpu_custom_call.1} parent=1 // pred_fallthru
      _
    // Predicated region
    $region46: #{tpu_custom_call.1} parent=1 // pred_check
      _
    $region47: #{tpu_custom_call.1} parent=1 // pred_check_branch
      %105 = sbr.rel (0) target = $region49
    $region48: #{tpu_custom_call.1} parent=1 // pred_region
      _
    $region49: #{tpu_custom_call.1} parent=1 // pred_fallthru
      _
    // Predicated region
    $region50: #{tpu_custom_call.1} parent=1 // pred_check
      _
    $region51: #{tpu_custom_call.1} parent=1 // pred_check_branch
      %107 = sbr.rel (0) target = $region53
    $region52: #{tpu_custom_call.1} parent=1 // pred_region
      %s109 = ssub.s32 1024, 1024
      %110 = vsyncadd [#allocation12], %s109
      %s111 = sshll.u32 [#allocation11], 4
      %s112 = int_to_ptr.vmem [resolvable:$true] %s111
      %117 = dma.hbm_to_vmem [thread:$0]  %s12, 1024, %s112, [#allocation12], 64, 64, 4
    $region53: #{tpu_custom_call.1} parent=1 // pred_fallthru
      _
    // Predicated region
    $region54: #{tpu_custom_call.1} parent=1 // pred_check
      _
    $region55: #{tpu_custom_call.1} parent=1 // pred_check_branch
      %119 = sbr.rel (0) target = $region57
    $region56: #{tpu_custom_call.1} parent=1 // pred_region
      _
    $region57: #{tpu_custom_call.1} parent=1 // pred_fallthru
      _
    // Predicated region
    $region58: #{tpu_custom_call.1} parent=1 // pred_check
      _
    $region59: #{tpu_custom_call.1} parent=1 // pred_check_branch
      %121 = sbr.rel (0) target = $region61
    $region60: #{tpu_custom_call.1} parent=1 // pred_region
      _
    $region61: #{tpu_custom_call.1} parent=1 // pred_fallthru
      _
    // Predicated region
    $region62: #{tpu_custom_call.1} parent=1 // pred_check
      _
    $region63: #{tpu_custom_call.1} parent=1 // pred_check_branch
      %123 = sbr.rel (0) target = $region65
    $region64: #{tpu_custom_call.1} parent=1 // pred_region
      _
    $region65: #{tpu_custom_call.1} parent=1 // pred_fallthru
      _
    // Predicated region
    $region66: #{tpu_custom_call.1} parent=1 // pred_check
      _
    $region67: #{tpu_custom_call.1} parent=1 // pred_check_branch
      %125 = sbr.rel (0) target = $region69
    $region68: #{tpu_custom_call.1} parent=1 // pred_region
      %s127 = ssub.s32 1024, 1024
      %128 = vsyncadd [#allocation12], %s127
      %s129 = sshll.u32 [#allocation13], 4
      %s130 = int_to_ptr.vmem [resolvable:$true] %s129
      %135 = dma.hbm_to_vmem [thread:$0]  %s16, 1024, %s130, [#allocation12], 64, 64, 4
    $region69: #{tpu_custom_call.1} parent=1 // pred_fallthru
      _
    // Predicated region
    $region70: #{tpu_custom_call.1} parent=1 // pred_check
      _
    $region71: #{tpu_custom_call.1} parent=1 // pred_check_branch
      %137 = sbr.rel (0) target = $region73
    $region72: #{tpu_custom_call.1} parent=1 // pred_region
      _
    $region73: #{tpu_custom_call.1} parent=1 // pred_fallthru
      _
    // Predicated region
    $region74: #{tpu_custom_call.1} parent=1 // pred_check
      _
    $region75: #{tpu_custom_call.1} parent=1 // pred_check_branch
      %139 = sbr.rel (0) target = $region77
    $region76: #{tpu_custom_call.1} parent=1 // pred_region
      %s141 = ssub.s32 16, 16
      %142 = vsyncadd [#allocation15], %s141
      %s144 = sshll.u32 [#allocation14], 4
      %s145 = int_to_ptr.vmem [resolvable:$true] %s144
      %147 = dma.hbm_to_vmem [thread:$0]  %s18, 16, %s145, [#allocation15]
    $region77: #{tpu_custom_call.1} parent=1 // pred_fallthru
      _
    // Predicated region
    $region78: #{tpu_custom_call.1} parent=1 // pred_check
      _
    $region79: #{tpu_custom_call.1} parent=1 // pred_check_branch
      %149 = sbr.rel (0) target = $region81
    $region80: #{tpu_custom_call.1} parent=1 // pred_region
      %s151 = ssub.s32 16, 16
      %152 = vsyncadd [#allocation15], %s151
      %s154 = sshll.u32 [#allocation16], 4
      %s155 = int_to_ptr.vmem [resolvable:$true] %s154
      %157 = dma.hbm_to_vmem [thread:$0]  %s19, 16, %s155, [#allocation15]
    $region81: #{tpu_custom_call.1} parent=1 // pred_fallthru
      _
    // Predicated region
    $region82: #{tpu_custom_call.1} parent=1 // pred_check
      _
    $region83: #{tpu_custom_call.1} parent=1 // pred_check_branch
      %159 = sbr.rel (0) target = $region85
    $region84: #{tpu_custom_call.1} parent=1 // pred_region
      _
    $region85: #{tpu_custom_call.1} parent=1 // pred_fallthru
      _
    // Predicated region
    $region86: #{tpu_custom_call.1} parent=1 // pred_check
      _
    $region87: #{tpu_custom_call.1} parent=1 // pred_check_branch
      %161 = sbr.rel (0) target = $region89
    $region88: #{tpu_custom_call.1} parent=1 // pred_region
      _
    $region89: #{tpu_custom_call.1} parent=1 // pred_fallthru
      _
    // Predicated region
    $region90: #{tpu_custom_call.1} parent=1 // pred_check
      _
    $region91: #{tpu_custom_call.1} parent=1 // pred_check_branch
      %163 = sbr.rel (0) target = $region93
    $region92: #{tpu_custom_call.1} parent=1 // pred_region
      %164 = dma.done [#allocation3], 128
    $region93: #{tpu_custom_call.1} parent=1 // pred_fallthru
      _
    // Predicated region
    $region94: #{tpu_custom_call.1} parent=1 // pred_check
      _
    $region95: #{tpu_custom_call.1} parent=1 // pred_check_branch
      %166 = sbr.rel (0) target = $region97
    $region96: #{tpu_custom_call.1} parent=1 // pred_region
      %167 = dma.done [#allocation6], 128
    $region97: #{tpu_custom_call.1} parent=1 // pred_fallthru
      _
    // Predicated region
    $region98: #{tpu_custom_call.1} parent=1 // pred_check
      _
    $region99: #{tpu_custom_call.1} parent=1 // pred_check_branch
      %169 = sbr.rel (0) target = $region101
    $region100: #{tpu_custom_call.1} parent=1 // pred_region
      %170 = dma.done [#allocation6], 1024
    $region101: #{tpu_custom_call.1} parent=1 // pred_fallthru
      _
    // Predicated region
    $region102: #{tpu_custom_call.1} parent=1 // pred_check
      _
    $region103: #{tpu_custom_call.1} parent=1 // pred_check_branch
      %172 = sbr.rel (0) target = $region105
    $region104: #{tpu_custom_call.1} parent=1 // pred_region
      %173 = dma.done [#allocation9], 1024
    $region105: #{tpu_custom_call.1} parent=1 // pred_fallthru
      _
    // Predicated region
    $region106: #{tpu_custom_call.1} parent=1 // pred_check
      _
    $region107: #{tpu_custom_call.1} parent=1 // pred_check_branch
      %175 = sbr.rel (0) target = $region109
    $region108: #{tpu_custom_call.1} parent=1 // pred_region
      %176 = dma.done [#allocation9], 1024
    $region109: #{tpu_custom_call.1} parent=1 // pred_fallthru
      _
    // Predicated region
    $region110: #{tpu_custom_call.1} parent=1 // pred_check
      _
    $region111: #{tpu_custom_call.1} parent=1 // pred_check_branch
      %178 = sbr.rel (0) target = $region113
    $region112: #{tpu_custom_call.1} parent=1 // pred_region
      %179 = dma.done [#allocation12], 1024
    $region113: #{tpu_custom_call.1} parent=1 // pred_fallthru
      _
    // Predicated region
    $region114: #{tpu_custom_call.1} parent=1 // pred_check
      _
    $region115: #{tpu_custom_call.1} parent=1 // pred_check_branch
      %181 = sbr.rel (0) target = $region117
    $region116: #{tpu_custom_call.1} parent=1 // pred_region
      %182 = dma.done [#allocation12], 1024
    $region117: #{tpu_custom_call.1} parent=1 // pred_fallthru
      _
    // Predicated region
    $region118: #{tpu_custom_call.1} parent=1 // pred_check
      _
    $region119: #{tpu_custom_call.1} parent=1 // pred_check_branch
      %184 = sbr.rel (0) target = $region121
    $region120: #{tpu_custom_call.1} parent=1 // pred_region
      %185 = dma.done [#allocation15], 16
    $region121: #{tpu_custom_call.1} parent=1 // pred_fallthru
      _
    // Predicated region
    $region122: #{tpu_custom_call.1} parent=1 // pred_check
      _
    $region123: #{tpu_custom_call.1} parent=1 // pred_check_branch
      %187 = sbr.rel (0) target = $region125
    $region124: #{tpu_custom_call.1} parent=1 // pred_region
      %188 = dma.done [#allocation15], 16
    $region125: #{tpu_custom_call.1} parent=1 // pred_fallthru
      _
    %v190 = vld [vmem:[#allocation2] sm:$0xff]
    %v191 = vpack.c.bf16 %v190, %v190
    %v192 = vld [vmem:[#allocation7] sm:$0xf]
    %v193 = vld [vmem:[#allocation7 + $0x4] sm:$0xf]
    %v194 = vld [vmem:[#allocation7 + $0x8] sm:$0xf]
    %v195 = vld [vmem:[#allocation7 + $0xc] sm:$0xf]
    %v196 = vld [vmem:[#allocation7 + $0x10] sm:$0xf]
    %v197 = vld [vmem:[#allocation7 + $0x14] sm:$0xf]
    %v198 = vld [vmem:[#allocation7 + $0x18] sm:$0xf]
    %v199 = vld [vmem:[#allocation7 + $0x1c] sm:$0xf]
    %v200 = vld [vmem:[#allocation7 + $0x20] sm:$0xf]
    %v201 = vld [vmem:[#allocation7 + $0x24] sm:$0xf]
    %v202 = vld [vmem:[#allocation7 + $0x28] sm:$0xf]
    %v203 = vld [vmem:[#allocation7 + $0x2c] sm:$0xf]
    %v204 = vld [vmem:[#allocation7 + $0x30] sm:$0xf]
    %v205 = vld [vmem:[#allocation7 + $0x34] sm:$0xf]
    %v206 = vld [vmem:[#allocation7 + $0x38] sm:$0xf]
    %v207 = vld [vmem:[#allocation7 + $0x3c] sm:$0xf]
    %v208 = vld [vmem:[%s3] sm:$0x1]
    %v210 = vlaneseq
    %v211 = vshrl.u32 %v210, 7
    %v212 = vsub.s32 0, %v211
    %v213 = vrot.slane %v208, %v212
    %v231 = vunpack.c.l.b16 %v192
    %v232 = vunpack.c.l.b16 %v193
    %v233 = vunpack.c.l.b16 %v194
    %v234 = vunpack.c.l.b16 %v195
    %v235 = vunpack.c.l.b16 %v196
    %v236 = vunpack.c.l.b16 %v197
    %v237 = vunpack.c.l.b16 %v198
    %v238 = vunpack.c.l.b16 %v199
    %v239 = vunpack.c.l.b16 %v200
    %v240 = vunpack.c.l.b16 %v201
    %v241 = vunpack.c.l.b16 %v202
    %v242 = vunpack.c.l.b16 %v203
    %v243 = vunpack.c.l.b16 %v204
    %v244 = vunpack.c.l.b16 %v205
    %v245 = vunpack.c.l.b16 %v206
    %v246 = vunpack.c.l.b16 %v207
    %v247 = vpack.c.b16 %v232, %v231
    %v248 = vpack.c.b16 %v234, %v233
    %v249 = vpack.c.b16 %v236, %v235
    %v250 = vpack.c.b16 %v238, %v237
    %v251 = vpack.c.b16 %v240, %v239
    %v252 = vpack.c.b16 %v242, %v241
    %v253 = vpack.c.b16 %v244, %v243
    %v254 = vpack.c.b16 %v246, %v245
    %263 = vmatprep.subr.bf16.mxu0 0
    %264 = vmatpush1.bf16.msra.mxu0 %v247
    %265 = vmatprep.subr.bf16.mxu0 0
    %266 = vmatpush1.bf16.msra.mxu0 %v248
    %267 = vmatprep.subr.bf16.mxu0 0
    %268 = vmatpush1.bf16.msra.mxu0 %v249
    %269 = vmatprep.subr.bf16.mxu0 0
    %270 = vmatpush1.bf16.msra.mxu0 %v250
    %271 = vmatprep.subr.bf16.mxu0 0
    %272 = vmatpush1.bf16.msra.mxu0 %v251
    %273 = vmatprep.subr.bf16.mxu0 0
    %274 = vmatpush1.bf16.msra.mxu0 %v252
    %275 = vmatprep.subr.bf16.mxu0 0
    %276 = vmatpush1.bf16.msra.mxu0 %v253
    %277 = vmatprep.subr.bf16.mxu0 0
    %278 = vmatpush1.bf16.msra.mxu0 %v254
    %279 = vmatprep.subr.bf16.mxu0 0
    %280 = vmatpush1.bf16.msra.mxu0 0
    %281 = vmatprep.subr.bf16.mxu0 0
    %282 = vmatpush1.bf16.msra.mxu0 0
    %283 = vmatprep.subr.bf16.mxu0 0
    %284 = vmatpush1.bf16.msra.mxu0 0
    %285 = vmatprep.subr.bf16.mxu0 0
    %286 = vmatpush1.bf16.msra.mxu0 0
    %287 = vmatprep.subr.bf16.mxu0 0
    %288 = vmatpush1.bf16.msra.mxu0 0
    %289 = vmatprep.subr.bf16.mxu0 0
    %290 = vmatpush1.bf16.msra.mxu0 0
    %291 = vmatprep.subr.bf16.mxu0 0
    %292 = vmatpush1.bf16.msra.mxu0 0
    %293 = vmatprep.subr.bf16.mxu0 0
    %294 = vmatpush1.bf16.msra.mxu0 0
    %295 = vmatprep.mubr.bf16.mxu0 0
    %296 = vmatmul.mubr.bf16.gmra.mrb[0].mxu0 %v191
    %v297 = vpop.f32.mrb[0].mxu0
    %v298 = vadd.f32 %v213, %v297
    %v299 = vpop.f32.mrb[0].mxu0
    %v300 = vpop.f32.mrb[0].mxu0
    %v301 = vpop.f32.mrb[0].mxu0
    %302 = vdwg.mxu0
    %v303 = vrot.slane %v298, 4
    %v304 = vadd.f32 %v298, %v303
    %v305 = vrot.slane %v304, 2
    %v306 = vadd.f32 %v304, %v305
    %v307 = vrot.slane %v306, 1
    %v308 = vadd.f32 %v306, %v307
    %v309 = vrcp.pop 8.0
    %v310 = vmul.f32 %v308, %v309
    %v311 = vmul.f32 %v298, %v298
    %v312 = vrot.slane %v311, 4
    %v313 = vadd.f32 %v311, %v312
    %v314 = vrot.slane %v313, 2
    %v315 = vadd.f32 %v313, %v314
    %v316 = vrot.slane %v315, 1
    %v317 = vadd.f32 %v315, %v316
    %v318 = vmul.f32 %v317, %v309
    %v319 = vmul.f32 %v310, %v310
    %v320 = vsub.f32 %v318, %v319
    %v321 = vmax.f32 %v320, 0.0
    %v322 = vld [vmem:[%s4] sm:$0x1]
    %v323 = vadd.f32 %v321, 1e-05
    %v324 = vrsqrt.pop %v323
    %v325 = vmul.f32 %v322, %v324
    %v326 = vsub.f32 %v298, %v310
    %v328 = vlaneseq
    %v329 = vshrl.u32 %v328, 7
    %v330 = vsub.s32 0, %v329
    %v331 = vrot.slane %v325, %v330
    %v333 = vmul.f32 %v326, %v331
    %v334 = vld [vmem:[%s5] sm:$0x1]
    %v336 = vlaneseq
    %v337 = vshrl.u32 %v336, 7
    %v338 = vsub.s32 0, %v337
    %v339 = vrot.slane %v334, %v338
    %v341 = vadd.f32 %v333, %v339
    %v342 = vmax.f32 %v341, 0.0
    %v343 = vpack.c.bf16 %v342, %v342
    %v344 = vld [vmem:[#allocation8] sm:$0xf]
    %v345 = vld [vmem:[#allocation8 + $0x4] sm:$0xf]
    %v346 = vld [vmem:[#allocation8 + $0x8] sm:$0xf]
    %v347 = vld [vmem:[#allocation8 + $0xc] sm:$0xf]
    %v348 = vld [vmem:[#allocation8 + $0x10] sm:$0xf]
    %v349 = vld [vmem:[#allocation8 + $0x14] sm:$0xf]
    %v350 = vld [vmem:[#allocation8 + $0x18] sm:$0xf]
    %v351 = vld [vmem:[#allocation8 + $0x1c] sm:$0xf]
    %v352 = vld [vmem:[#allocation8 + $0x20] sm:$0xf]
    %v353 = vld [vmem:[#allocation8 + $0x24] sm:$0xf]
    %v354 = vld [vmem:[#allocation8 + $0x28] sm:$0xf]
    %v355 = vld [vmem:[#allocation8 + $0x2c] sm:$0xf]
    %v356 = vld [vmem:[#allocation8 + $0x30] sm:$0xf]
    %v357 = vld [vmem:[#allocation8 + $0x34] sm:$0xf]
    %v358 = vld [vmem:[#allocation8 + $0x38] sm:$0xf]
    %v359 = vld [vmem:[#allocation8 + $0x3c] sm:$0xf]
    %v360 = vld [vmem:[%s7] sm:$0x1]
    %v362 = vlaneseq
    %v363 = vshrl.u32 %v362, 7
    %v364 = vsub.s32 0, %v363
    %v365 = vrot.slane %v360, %v364
    %v383 = vunpack.c.l.b16 %v344
    %v384 = vunpack.c.l.b16 %v345
    %v385 = vunpack.c.l.b16 %v346
    %v386 = vunpack.c.l.b16 %v347
    %v387 = vunpack.c.l.b16 %v348
    %v388 = vunpack.c.l.b16 %v349
    %v389 = vunpack.c.l.b16 %v350
    %v390 = vunpack.c.l.b16 %v351
    %v391 = vunpack.c.l.b16 %v352
    %v392 = vunpack.c.l.b16 %v353
    %v393 = vunpack.c.l.b16 %v354
    %v394 = vunpack.c.l.b16 %v355
    %v395 = vunpack.c.l.b16 %v356
    %v396 = vunpack.c.l.b16 %v357
    %v397 = vunpack.c.l.b16 %v358
    %v398 = vunpack.c.l.b16 %v359
    %v399 = vpack.c.b16 %v384, %v383
    %v400 = vpack.c.b16 %v386, %v385
    %v401 = vpack.c.b16 %v388, %v387
    %v402 = vpack.c.b16 %v390, %v389
    %v403 = vpack.c.b16 %v392, %v391
    %v404 = vpack.c.b16 %v394, %v393
    %v405 = vpack.c.b16 %v396, %v395
    %v406 = vpack.c.b16 %v398, %v397
    %415 = vmatprep.subr.bf16.mxu0 0
    %416 = vmatpush1.bf16.msra.mxu0 %v399
    %417 = vmatprep.subr.bf16.mxu0 0
    %418 = vmatpush1.bf16.msra.mxu0 %v400
    %419 = vmatprep.subr.bf16.mxu0 0
    %420 = vmatpush1.bf16.msra.mxu0 %v401
    %421 = vmatprep.subr.bf16.mxu0 0
    %422 = vmatpush1.bf16.msra.mxu0 %v402
    %423 = vmatprep.subr.bf16.mxu0 0
    %424 = vmatpush1.bf16.msra.mxu0 %v403
    %425 = vmatprep.subr.bf16.mxu0 0
    %426 = vmatpush1.bf16.msra.mxu0 %v404
    %427 = vmatprep.subr.bf16.mxu0 0
    %428 = vmatpush1.bf16.msra.mxu0 %v405
    %429 = vmatprep.subr.bf16.mxu0 0
    %430 = vmatpush1.bf16.msra.mxu0 %v406
    %431 = vmatprep.subr.bf16.mxu0 0
    %432 = vmatpush1.bf16.msra.mxu0 0
    %433 = vmatprep.subr.bf16.mxu0 0
    %434 = vmatpush1.bf16.msra.mxu0 0
    %435 = vmatprep.subr.bf16.mxu0 0
    %436 = vmatpush1.bf16.msra.mxu0 0
    %437 = vmatprep.subr.bf16.mxu0 0
    %438 = vmatpush1.bf16.msra.mxu0 0
    %439 = vmatprep.subr.bf16.mxu0 0
    %440 = vmatpush1.bf16.msra.mxu0 0
    %441 = vmatprep.subr.bf16.mxu0 0
    %442 = vmatpush1.bf16.msra.mxu0 0
    %443 = vmatprep.subr.bf16.mxu0 0
    %444 = vmatpush1.bf16.msra.mxu0 0
    %445 = vmatprep.subr.bf16.mxu0 0
    %446 = vmatpush1.bf16.msra.mxu0 0
    %447 = vmatprep.mubr.bf16.mxu0 0
    %448 = vmatmul.mubr.bf16.gmra.mrb[0].mxu0 %v343
    %v449 = vpop.f32.mrb[0].mxu0
    %v450 = vadd.f32 %v365, %v449
    %v451 = vpop.f32.mrb[0].mxu0
    %v452 = vpop.f32.mrb[0].mxu0
    %v453 = vpop.f32.mrb[0].mxu0
    %454 = vdwg.mxu0
    %v455 = vrot.slane %v450, 4
    %v456 = vadd.f32 %v450, %v455
    %v457 = vrot.slane %v456, 2
    %v458 = vadd.f32 %v456, %v457
    %v459 = vrot.slane %v458, 1
    %v460 = vadd.f32 %v458, %v459
    %v461 = vmul.f32 %v460, %v309
    %v462 = vmul.f32 %v450, %v450
    %v463 = vrot.slane %v462, 4
    %v464 = vadd.f32 %v462, %v463
    %v465 = vrot.slane %v464, 2
    %v466 = vadd.f32 %v464, %v465
    %v467 = vrot.slane %v466, 1
    %v468 = vadd.f32 %v466, %v467
    %v469 = vmul.f32 %v468, %v309
    %v470 = vmul.f32 %v461, %v461
    %v471 = vsub.f32 %v469, %v470
    %v472 = vmax.f32 %v471, 0.0
    %v473 = vld [vmem:[%s8] sm:$0x1]
    %v474 = vadd.f32 %v472, 1e-05
    %v475 = vrsqrt.pop %v474
    %v476 = vmul.f32 %v473, %v475
    %v477 = vsub.f32 %v450, %v461
    %v479 = vlaneseq
    %v480 = vshrl.u32 %v479, 7
    %v481 = vsub.s32 0, %v480
    %v482 = vrot.slane %v476, %v481
    %v484 = vmul.f32 %v477, %v482
    %v485 = vld [vmem:[%s9] sm:$0x1]
    %v487 = vlaneseq
    %v488 = vshrl.u32 %v487, 7
    %v489 = vsub.s32 0, %v488
    %v490 = vrot.slane %v485, %v489
    %v492 = vadd.f32 %v484, %v490
    %v493 = vmax.f32 %v492, 0.0
    %v494 = vpack.c.bf16 %v493, %v493
    %v495 = vld [vmem:[#allocation10] sm:$0xf]
    %v496 = vld [vmem:[#allocation10 + $0x4] sm:$0xf]
    %v497 = vld [vmem:[#allocation10 + $0x8] sm:$0xf]
    %v498 = vld [vmem:[#allocation10 + $0xc] sm:$0xf]
    %v499 = vld [vmem:[#allocation10 + $0x10] sm:$0xf]
    %v500 = vld [vmem:[#allocation10 + $0x14] sm:$0xf]
    %v501 = vld [vmem:[#allocation10 + $0x18] sm:$0xf]
    %v502 = vld [vmem:[#allocation10 + $0x1c] sm:$0xf]
    %v503 = vld [vmem:[#allocation10 + $0x20] sm:$0xf]
    %v504 = vld [vmem:[#allocation10 + $0x24] sm:$0xf]
    %v505 = vld [vmem:[#allocation10 + $0x28] sm:$0xf]
    %v506 = vld [vmem:[#allocation10 + $0x2c] sm:$0xf]
    %v507 = vld [vmem:[#allocation10 + $0x30] sm:$0xf]
    %v508 = vld [vmem:[#allocation10 + $0x34] sm:$0xf]
    %v509 = vld [vmem:[#allocation10 + $0x38] sm:$0xf]
    %v510 = vld [vmem:[#allocation10 + $0x3c] sm:$0xf]
    %v511 = vld [vmem:[%s11] sm:$0x1]
    %v513 = vlaneseq
    %v514 = vshrl.u32 %v513, 7
    %v515 = vsub.s32 0, %v514
    %v516 = vrot.slane %v511, %v515
    %v534 = vunpack.c.l.b16 %v495
    %v535 = vunpack.c.l.b16 %v496
    %v536 = vunpack.c.l.b16 %v497
    %v537 = vunpack.c.l.b16 %v498
    %v538 = vunpack.c.l.b16 %v499
    %v539 = vunpack.c.l.b16 %v500
    %v540 = vunpack.c.l.b16 %v501
    %v541 = vunpack.c.l.b16 %v502
    %v542 = vunpack.c.l.b16 %v503
    %v543 = vunpack.c.l.b16 %v504
    %v544 = vunpack.c.l.b16 %v505
    %v545 = vunpack.c.l.b16 %v506
    %v546 = vunpack.c.l.b16 %v507
    %v547 = vunpack.c.l.b16 %v508
    %v548 = vunpack.c.l.b16 %v509
    %v549 = vunpack.c.l.b16 %v510
    %v550 = vpack.c.b16 %v535, %v534
    %v551 = vpack.c.b16 %v537, %v536
    %v552 = vpack.c.b16 %v539, %v538
    %v553 = vpack.c.b16 %v541, %v540
    %v554 = vpack.c.b16 %v543, %v542
    %v555 = vpack.c.b16 %v545, %v544
    %v556 = vpack.c.b16 %v547, %v546
    %v557 = vpack.c.b16 %v549, %v548
    %566 = vmatprep.subr.bf16.mxu0 0
    %567 = vmatpush1.bf16.msra.mxu0 %v550
    %568 = vmatprep.subr.bf16.mxu0 0
    %569 = vmatpush1.bf16.msra.mxu0 %v551
    %570 = vmatprep.subr.bf16.mxu0 0
    %571 = vmatpush1.bf16.msra.mxu0 %v552
    %572 = vmatprep.subr.bf16.mxu0 0
    %573 = vmatpush1.bf16.msra.mxu0 %v553
    %574 = vmatprep.subr.bf16.mxu0 0
    %575 = vmatpush1.bf16.msra.mxu0 %v554
    %576 = vmatprep.subr.bf16.mxu0 0
    %577 = vmatpush1.bf16.msra.mxu0 %v555
    %578 = vmatprep.subr.bf16.mxu0 0
    %579 = vmatpush1.bf16.msra.mxu0 %v556
    %580 = vmatprep.subr.bf16.mxu0 0
    %581 = vmatpush1.bf16.msra.mxu0 %v557
    %582 = vmatprep.subr.bf16.mxu0 0
    %583 = vmatpush1.bf16.msra.mxu0 0
    %584 = vmatprep.subr.bf16.mxu0 0
    %585 = vmatpush1.bf16.msra.mxu0 0
    %586 = vmatprep.subr.bf16.mxu0 0
    %587 = vmatpush1.bf16.msra.mxu0 0
    %588 = vmatprep.subr.bf16.mxu0 0
    %589 = vmatpush1.bf16.msra.mxu0 0
    %590 = vmatprep.subr.bf16.mxu0 0
    %591 = vmatpush1.bf16.msra.mxu0 0
    %592 = vmatprep.subr.bf16.mxu0 0
    %593 = vmatpush1.bf16.msra.mxu0 0
    %594 = vmatprep.subr.bf16.mxu0 0
    %595 = vmatpush1.bf16.msra.mxu0 0
    %596 = vmatprep.subr.bf16.mxu0 0
    %597 = vmatpush1.bf16.msra.mxu0 0
    %598 = vmatprep.mubr.bf16.mxu0 0
    %599 = vmatmul.mubr.bf16.gmra.mrb[0].mxu0 %v494
    %v600 = vpop.f32.mrb[0].mxu0
    %v601 = vadd.f32 %v516, %v600
    %v602 = vpop.f32.mrb[0].mxu0
    %v603 = vpop.f32.mrb[0].mxu0
    %v604 = vpop.f32.mrb[0].mxu0
    %605 = vdwg.mxu0
    %v606 = vlaneseq
    %v607 = vand.u32 %v606, 127
    %vm608 = vcmp.lt.s32.totalorder %v607, 8
    %vm609 = vcmp.gt.f32.partialorder %v601, 20.0
    %v610 = vmin.f32 %v601, 20.0
    %v611 = vmul.f32 %v610, 1.442695
    %v612 = vpow.pop %v611
    %v613 = vadd.f32 %v612, 1.0
    %v614 = vlog2.pop %v613
    %v615 = vmul.f32 %v614, 0.6931472
    %v616 = vmul.f32 -0.5, %v612
    %v617 = vadd.f32 %v616, 1.0
    %v618 = vmul.f32 %v617, %v612
    %v619 = vand.u32 2147483647, %v612
    %vm620 = vcmp.lt.f32.partialorder %v619, 0.0004427343
    %v621 = vsel %vm620, %v618, %v615
    %v622 = vsel %vm609, %v601, %v621
    %v623 = vsel %vm608, %v601, %v622
    %624 = vrot.lane.b32.xlu0 %v623, 120
    %v625 = vpop.permute.xlu0 %624
    %v626 = vld [vmem:[#allocation5] sm:$0xff]
    %v627 = vmul.f32 %v626, %v625
    %v628 = vadd.f32 %v601, %v627
    %v629 = vpack.c.bf16 %v628, %v628
    %v630 = vld [vmem:[#allocation11] sm:$0xf]
    %v631 = vld [vmem:[#allocation11 + $0x4] sm:$0xf]
    %v632 = vld [vmem:[#allocation11 + $0x8] sm:$0xf]
    %v633 = vld [vmem:[#allocation11 + $0xc] sm:$0xf]
    %v634 = vld [vmem:[#allocation11 + $0x10] sm:$0xf]
    %v635 = vld [vmem:[#allocation11 + $0x14] sm:$0xf]
    %v636 = vld [vmem:[#allocation11 + $0x18] sm:$0xf]
    %v637 = vld [vmem:[#allocation11 + $0x1c] sm:$0xf]
    %v638 = vld [vmem:[#allocation11 + $0x20] sm:$0xf]
    %v639 = vld [vmem:[#allocation11 + $0x24] sm:$0xf]
    %v640 = vld [vmem:[#allocation11 + $0x28] sm:$0xf]
    %v641 = vld [vmem:[#allocation11 + $0x2c] sm:$0xf]
    %v642 = vld [vmem:[#allocation11 + $0x30] sm:$0xf]
    %v643 = vld [vmem:[#allocation11 + $0x34] sm:$0xf]
    %v644 = vld [vmem:[#allocation11 + $0x38] sm:$0xf]
    %v645 = vld [vmem:[#allocation11 + $0x3c] sm:$0xf]
    %v646 = vld [vmem:[%s13] sm:$0x1]
    %v648 = vlaneseq
    %v649 = vshrl.u32 %v648, 7
    %v650 = vsub.s32 0, %v649
    %v651 = vrot.slane %v646, %v650
    %v669 = vunpack.c.l.b16 %v630
    %v670 = vunpack.c.l.b16 %v631
    %v671 = vunpack.c.l.b16 %v632
    %v672 = vunpack.c.l.b16 %v633
    %v673 = vunpack.c.l.b16 %v634
    %v674 = vunpack.c.l.b16 %v635
    %v675 = vunpack.c.l.b16 %v636
    %v676 = vunpack.c.l.b16 %v637
    %v677 = vunpack.c.l.b16 %v638
    %v678 = vunpack.c.l.b16 %v639
    %v679 = vunpack.c.l.b16 %v640
    %v680 = vunpack.c.l.b16 %v641
    %v681 = vunpack.c.l.b16 %v642
    %v682 = vunpack.c.l.b16 %v643
    %v683 = vunpack.c.l.b16 %v644
    %v684 = vunpack.c.l.b16 %v645
    %v685 = vpack.c.b16 %v670, %v669
    %v686 = vpack.c.b16 %v672, %v671
    %v687 = vpack.c.b16 %v674, %v673
    %v688 = vpack.c.b16 %v676, %v675
    %v689 = vpack.c.b16 %v678, %v677
    %v690 = vpack.c.b16 %v680, %v679
    %v691 = vpack.c.b16 %v682, %v681
    %v692 = vpack.c.b16 %v684, %v683
    %701 = vmatprep.subr.bf16.mxu0 0
    %702 = vmatpush1.bf16.msra.mxu0 %v685
    %703 = vmatprep.subr.bf16.mxu0 0
    %704 = vmatpush1.bf16.msra.mxu0 %v686
    %705 = vmatprep.subr.bf16.mxu0 0
    %706 = vmatpush1.bf16.msra.mxu0 %v687
    %707 = vmatprep.subr.bf16.mxu0 0
    %708 = vmatpush1.bf16.msra.mxu0 %v688
    %709 = vmatprep.subr.bf16.mxu0 0
    %710 = vmatpush1.bf16.msra.mxu0 %v689
    %711 = vmatprep.subr.bf16.mxu0 0
    %712 = vmatpush1.bf16.msra.mxu0 %v690
    %713 = vmatprep.subr.bf16.mxu0 0
    %714 = vmatpush1.bf16.msra.mxu0 %v691
    %715 = vmatprep.subr.bf16.mxu0 0
    %716 = vmatpush1.bf16.msra.mxu0 %v692
    %717 = vmatprep.subr.bf16.mxu0 0
    %718 = vmatpush1.bf16.msra.mxu0 0
    %719 = vmatprep.subr.bf16.mxu0 0
    %720 = vmatpush1.bf16.msra.mxu0 0
    %721 = vmatprep.subr.bf16.mxu0 0
    %722 = vmatpush1.bf16.msra.mxu0 0
    %723 = vmatprep.subr.bf16.mxu0 0
    %724 = vmatpush1.bf16.msra.mxu0 0
    %725 = vmatprep.subr.bf16.mxu0 0
    %726 = vmatpush1.bf16.msra.mxu0 0
    %727 = vmatprep.subr.bf16.mxu0 0
    %728 = vmatpush1.bf16.msra.mxu0 0
    %729 = vmatprep.subr.bf16.mxu0 0
    %730 = vmatpush1.bf16.msra.mxu0 0
    %731 = vmatprep.subr.bf16.mxu0 0
    %732 = vmatpush1.bf16.msra.mxu0 0
    %733 = vmatprep.mubr.bf16.mxu0 0
    %734 = vmatmul.mubr.bf16.gmra.mrb[0].mxu0 %v629
    %v735 = vpop.f32.mrb[0].mxu0
    %v736 = vadd.f32 %v651, %v735
    %v737 = vpop.f32.mrb[0].mxu0
    %v738 = vpop.f32.mrb[0].mxu0
    %v739 = vpop.f32.mrb[0].mxu0
    %740 = vdwg.mxu0
    %v741 = vrot.slane %v736, 4
    %v742 = vadd.f32 %v736, %v741
    %v743 = vrot.slane %v742, 2
    %v744 = vadd.f32 %v742, %v743
    %v745 = vrot.slane %v744, 1
    %v746 = vadd.f32 %v744, %v745
    %v747 = vmul.f32 %v746, %v309
    %v748 = vmul.f32 %v736, %v736
    %v749 = vrot.slane %v748, 4
    %v750 = vadd.f32 %v748, %v749
    %v751 = vrot.slane %v750, 2
    %v752 = vadd.f32 %v750, %v751
    %v753 = vrot.slane %v752, 1
    %v754 = vadd.f32 %v752, %v753
    %v755 = vmul.f32 %v754, %v309
    %v756 = vmul.f32 %v747, %v747
    %v757 = vsub.f32 %v755, %v756
    %v758 = vmax.f32 %v757, 0.0
    %v759 = vld [vmem:[%s14] sm:$0x1]
    %v760 = vadd.f32 %v758, 1e-05
    %v761 = vrsqrt.pop %v760
    %v762 = vmul.f32 %v759, %v761
    %v763 = vsub.f32 %v736, %v747
    %v765 = vlaneseq
    %v766 = vshrl.u32 %v765, 7
    %v767 = vsub.s32 0, %v766
    %v768 = vrot.slane %v762, %v767
    %v770 = vmul.f32 %v763, %v768
    %v771 = vld [vmem:[%s15] sm:$0x1]
    %v773 = vlaneseq
    %v774 = vshrl.u32 %v773, 7
    %v775 = vsub.s32 0, %v774
    %v776 = vrot.slane %v771, %v775
    %v778 = vadd.f32 %v770, %v776
    %v779 = vmax.f32 %v778, 0.0
    %v780 = vpack.c.bf16 %v779, %v779
    %v781 = vld [vmem:[#allocation13] sm:$0xf]
    %v782 = vld [vmem:[#allocation13 + $0x4] sm:$0xf]
    %v783 = vld [vmem:[#allocation13 + $0x8] sm:$0xf]
    %v784 = vld [vmem:[#allocation13 + $0xc] sm:$0xf]
    %v785 = vld [vmem:[#allocation13 + $0x10] sm:$0xf]
    %v786 = vld [vmem:[#allocation13 + $0x14] sm:$0xf]
    %v787 = vld [vmem:[#allocation13 + $0x18] sm:$0xf]
    %v788 = vld [vmem:[#allocation13 + $0x1c] sm:$0xf]
    %v789 = vld [vmem:[#allocation13 + $0x20] sm:$0xf]
    %v790 = vld [vmem:[#allocation13 + $0x24] sm:$0xf]
    %v791 = vld [vmem:[#allocation13 + $0x28] sm:$0xf]
    %v792 = vld [vmem:[#allocation13 + $0x2c] sm:$0xf]
    %v793 = vld [vmem:[#allocation13 + $0x30] sm:$0xf]
    %v794 = vld [vmem:[#allocation13 + $0x34] sm:$0xf]
    %v795 = vld [vmem:[#allocation13 + $0x38] sm:$0xf]
    %v796 = vld [vmem:[#allocation13 + $0x3c] sm:$0xf]
    %v797 = vld [vmem:[%s17] sm:$0x1]
    %v799 = vlaneseq
    %v800 = vshrl.u32 %v799, 7
    %v801 = vsub.s32 0, %v800
    %v802 = vrot.slane %v797, %v801
    %v820 = vunpack.c.l.b16 %v781
    %v821 = vunpack.c.l.b16 %v782
    %v822 = vunpack.c.l.b16 %v783
    %v823 = vunpack.c.l.b16 %v784
    %v824 = vunpack.c.l.b16 %v785
    %v825 = vunpack.c.l.b16 %v786
    %v826 = vunpack.c.l.b16 %v787
    %v827 = vunpack.c.l.b16 %v788
    %v828 = vunpack.c.l.b16 %v789
    %v829 = vunpack.c.l.b16 %v790
    %v830 = vunpack.c.l.b16 %v791
    %v831 = vunpack.c.l.b16 %v792
    %v832 = vunpack.c.l.b16 %v793
    %v833 = vunpack.c.l.b16 %v794
    %v834 = vunpack.c.l.b16 %v795
    %v835 = vunpack.c.l.b16 %v796
    %v836 = vpack.c.b16 %v821, %v820
    %v837 = vpack.c.b16 %v823, %v822
    %v838 = vpack.c.b16 %v825, %v824
    %v839 = vpack.c.b16 %v827, %v826
    %v840 = vpack.c.b16 %v829, %v828
    %v841 = vpack.c.b16 %v831, %v830
    %v842 = vpack.c.b16 %v833, %v832
    %v843 = vpack.c.b16 %v835, %v834
    %852 = vmatprep.subr.bf16.mxu0 0
    %853 = vmatpush1.bf16.msra.mxu0 %v836
    %854 = vmatprep.subr.bf16.mxu0 0
    %855 = vmatpush1.bf16.msra.mxu0 %v837
    %856 = vmatprep.subr.bf16.mxu0 0
    %857 = vmatpush1.bf16.msra.mxu0 %v838
    %858 = vmatprep.subr.bf16.mxu0 0
    %859 = vmatpush1.bf16.msra.mxu0 %v839
    %860 = vmatprep.subr.bf16.mxu0 0
    %861 = vmatpush1.bf16.msra.mxu0 %v840
    %862 = vmatprep.subr.bf16.mxu0 0
    %863 = vmatpush1.bf16.msra.mxu0 %v841
    %864 = vmatprep.subr.bf16.mxu0 0
    %865 = vmatpush1.bf16.msra.mxu0 %v842
    %866 = vmatprep.subr.bf16.mxu0 0
    %867 = vmatpush1.bf16.msra.mxu0 %v843
    %868 = vmatprep.subr.bf16.mxu0 0
    %869 = vmatpush1.bf16.msra.mxu0 0
    %870 = vmatprep.subr.bf16.mxu0 0
    %871 = vmatpush1.bf16.msra.mxu0 0
    %872 = vmatprep.subr.bf16.mxu0 0
    %873 = vmatpush1.bf16.msra.mxu0 0
    %874 = vmatprep.subr.bf16.mxu0 0
    %875 = vmatpush1.bf16.msra.mxu0 0
    %876 = vmatprep.subr.bf16.mxu0 0
    %877 = vmatpush1.bf16.msra.mxu0 0
    %878 = vmatprep.subr.bf16.mxu0 0
    %879 = vmatpush1.bf16.msra.mxu0 0
    %880 = vmatprep.subr.bf16.mxu0 0
    %881 = vmatpush1.bf16.msra.mxu0 0
    %882 = vmatprep.subr.bf16.mxu0 0
    %883 = vmatpush1.bf16.msra.mxu0 0
    %884 = vmatprep.mubr.bf16.mxu0 0
    %885 = vmatmul.mubr.bf16.gmra.mrb[0].mxu0 %v780
    %v886 = vpop.f32.mrb[0].mxu0
    %v887 = vadd.f32 %v802, %v886
    %v888 = vpop.f32.mrb[0].mxu0
    %v889 = vpop.f32.mrb[0].mxu0
    %v890 = vpop.f32.mrb[0].mxu0
    %891 = vdwg.mxu0
    %v892 = vrot.slane %v887, 4
    %v893 = vadd.f32 %v887, %v892
    %v894 = vrot.slane %v893, 2
    %v895 = vadd.f32 %v893, %v894
    %v896 = vrot.slane %v895, 1
    %v897 = vadd.f32 %v895, %v896
    %v898 = vmul.f32 %v897, %v309
    %v899 = vmul.f32 %v887, %v887
    %v900 = vrot.slane %v899, 4
    %v901 = vadd.f32 %v899, %v900
    %v902 = vrot.slane %v901, 2
    %v903 = vadd.f32 %v901, %v902
    %v904 = vrot.slane %v903, 1
    %v905 = vadd.f32 %v903, %v904
    %v906 = vmul.f32 %v905, %v309
    %v907 = vmul.f32 %v898, %v898
    %v908 = vsub.f32 %v906, %v907
    %v909 = vmax.f32 %v908, 0.0
    %v910 = vld [vmem:[#allocation14] sm:$0x1]
    %v911 = vadd.f32 %v909, 1e-05
    %v912 = vrsqrt.pop %v911
    %v913 = vmul.f32 %v910, %v912
    %v914 = vsub.f32 %v887, %v898
    %v916 = vlaneseq
    %v917 = vshrl.u32 %v916, 7
    %v918 = vsub.s32 0, %v917
    %v919 = vrot.slane %v913, %v918
    %v921 = vmul.f32 %v914, %v919
    %v922 = vld [vmem:[#allocation16] sm:$0x1]
    %v924 = vlaneseq
    %v925 = vshrl.u32 %v924, 7
    %v926 = vsub.s32 0, %v925
    %v927 = vrot.slane %v922, %v926
    %v929 = vadd.f32 %v921, %v927
    %v930 = vmax.f32 %v929, 0.0
    %v931 = vpack.c.bf16 %v930, %v930
    %v932 = vld [vmem:[%s20] sm:$0xf]
    %v933 = vld [vmem:[%s20 + $0x4] sm:$0xf]
    %v934 = vld [vmem:[%s20 + $0x8] sm:$0xf]
    %v935 = vld [vmem:[%s20 + $0xc] sm:$0xf]
    %v936 = vld [vmem:[%s20 + $0x10] sm:$0xf]
    %v937 = vld [vmem:[%s20 + $0x14] sm:$0xf]
    %v938 = vld [vmem:[%s20 + $0x18] sm:$0xf]
    %v939 = vld [vmem:[%s20 + $0x1c] sm:$0xf]
    %v940 = vld [vmem:[%s20 + $0x20] sm:$0xf]
    %v941 = vld [vmem:[%s20 + $0x24] sm:$0xf]
    %v942 = vld [vmem:[%s20 + $0x28] sm:$0xf]
    %v943 = vld [vmem:[%s20 + $0x2c] sm:$0xf]
    %v944 = vld [vmem:[%s20 + $0x30] sm:$0xf]
    %v945 = vld [vmem:[%s20 + $0x34] sm:$0xf]
    %v946 = vld [vmem:[%s20 + $0x38] sm:$0xf]
    %v947 = vld [vmem:[%s20 + $0x3c] sm:$0xf]
    %v948 = vld [vmem:[%s21] sm:$0x1]
    %v950 = vlaneseq
    %v951 = vshrl.u32 %v950, 7
    %v952 = vsub.s32 0, %v951
    %v953 = vrot.slane %v948, %v952
    %v971 = vunpack.c.l.b16 %v932
    %v972 = vunpack.c.l.b16 %v933
    %v973 = vunpack.c.l.b16 %v934
    %v974 = vunpack.c.l.b16 %v935
    %v975 = vunpack.c.l.b16 %v936
    %v976 = vunpack.c.l.b16 %v937
    %v977 = vunpack.c.l.b16 %v938
    %v978 = vunpack.c.l.b16 %v939
    %v979 = vunpack.c.l.b16 %v940
    %v980 = vunpack.c.l.b16 %v941
    %v981 = vunpack.c.l.b16 %v942
    %v982 = vunpack.c.l.b16 %v943
    %v983 = vunpack.c.l.b16 %v944
    %v984 = vunpack.c.l.b16 %v945
    %v985 = vunpack.c.l.b16 %v946
    %v986 = vunpack.c.l.b16 %v947
    %v987 = vpack.c.b16 %v972, %v971
    %v988 = vpack.c.b16 %v974, %v973
    %v989 = vpack.c.b16 %v976, %v975
    %v990 = vpack.c.b16 %v978, %v977
    %v991 = vpack.c.b16 %v980, %v979
    %v992 = vpack.c.b16 %v982, %v981
    %v993 = vpack.c.b16 %v984, %v983
    %v994 = vpack.c.b16 %v986, %v985
    %1003 = vmatprep.subr.bf16.mxu0 0
    %1004 = vmatpush1.bf16.msra.mxu0 %v987
    %1005 = vmatprep.subr.bf16.mxu0 0
    %1006 = vmatpush1.bf16.msra.mxu0 %v988
    %1007 = vmatprep.subr.bf16.mxu0 0
    %1008 = vmatpush1.bf16.msra.mxu0 %v989
    %1009 = vmatprep.subr.bf16.mxu0 0
    %1010 = vmatpush1.bf16.msra.mxu0 %v990
    %1011 = vmatprep.subr.bf16.mxu0 0
    %1012 = vmatpush1.bf16.msra.mxu0 %v991
    %1013 = vmatprep.subr.bf16.mxu0 0
    %1014 = vmatpush1.bf16.msra.mxu0 %v992
    %1015 = vmatprep.subr.bf16.mxu0 0
    %1016 = vmatpush1.bf16.msra.mxu0 %v993
    %1017 = vmatprep.subr.bf16.mxu0 0
    %1018 = vmatpush1.bf16.msra.mxu0 %v994
    %1019 = vmatprep.subr.bf16.mxu0 0
    %1020 = vmatpush1.bf16.msra.mxu0 0
    %1021 = vmatprep.subr.bf16.mxu0 0
    %1022 = vmatpush1.bf16.msra.mxu0 0
    %1023 = vmatprep.subr.bf16.mxu0 0
    %1024 = vmatpush1.bf16.msra.mxu0 0
    %1025 = vmatprep.subr.bf16.mxu0 0
    %1026 = vmatpush1.bf16.msra.mxu0 0
    %1027 = vmatprep.subr.bf16.mxu0 0
    %1028 = vmatpush1.bf16.msra.mxu0 0
    %1029 = vmatprep.subr.bf16.mxu0 0
    %1030 = vmatpush1.bf16.msra.mxu0 0
    %1031 = vmatprep.subr.bf16.mxu0 0
    %1032 = vmatpush1.bf16.msra.mxu0 0
    %1033 = vmatprep.subr.bf16.mxu0 0
    %1034 = vmatpush1.bf16.msra.mxu0 0
    %1035 = vmatprep.mubr.bf16.mxu0 0
    %1036 = vmatmul.mubr.bf16.gmra.mrb[0].mxu0 %v931
    %v1037 = vpop.f32.mrb[0].mxu0
    %v1038 = vadd.f32 %v953, %v1037
    %v1039 = vpop.f32.mrb[0].mxu0
    %v1040 = vpop.f32.mrb[0].mxu0
    %v1041 = vpop.f32.mrb[0].mxu0
    %1042 = vdwg.mxu0
    %1043 = vst [vmem:[#allocation17] sm:$0xff] %v1038
    %1044 = vst [vmem:[#allocation18] sm:$0xff] %v623
    // Predicated region
    $region126: #{tpu_custom_call.1} parent=1 // pred_check
      _
    $region127: #{tpu_custom_call.1} parent=1 // pred_check_branch
      %1046 = sbr.rel (0) target = $region129
    $region128: #{tpu_custom_call.1} parent=1 // pred_region
      %s1048 = ssub.s32 128, 128
      %1049 = vsyncadd [#allocation4], %s1048
      %s1051 = sshll.u32 [#allocation17], 4
      %s1052 = int_to_ptr.vmem [resolvable:$true] %s1051
      %1054 = dma.vmem_to_hbm [thread:$0]  %s1052, 128, %s22, [#allocation4]
    $region129: #{tpu_custom_call.1} parent=1 // pred_fallthru
      _
    // Predicated region
    $region130: #{tpu_custom_call.1} parent=1 // pred_check
      _
    $region131: #{tpu_custom_call.1} parent=1 // pred_check_branch
      %1056 = sbr.rel (0) target = $region133
    $region132: #{tpu_custom_call.1} parent=1 // pred_region
      %s1058 = ssub.s32 128, 128
      %1059 = vsyncadd [#allocation19], %s1058
      %s1061 = sshll.u32 [#allocation18], 4
      %s1062 = int_to_ptr.vmem [resolvable:$true] %s1061
      %1064 = dma.vmem_to_hbm [thread:$0]  %s1062, 128, %s23, [#allocation19]
    $region133: #{tpu_custom_call.1} parent=1 // pred_fallthru
      _
    // Predicated region
    $region134: #{tpu_custom_call.1} parent=1 // pred_check
      _
    $region135: #{tpu_custom_call.1} parent=1 // pred_check_branch
      %1066 = sbr.rel (0) target = $region137
    $region136: #{tpu_custom_call.1} parent=1 // pred_region
      %1067 = dma.done [#allocation4], 128
    $region137: #{tpu_custom_call.1} parent=1 // pred_fallthru
      _
    // Predicated region
    $region138: #{tpu_custom_call.1} parent=1 // pred_check
      _
    $region139: #{tpu_custom_call.1} parent=1 // pred_check_branch
      %1069 = sbr.rel (0) target = $region141
    $region140: #{tpu_custom_call.1} parent=1 // pred_region
      %1070 = dma.done [#allocation19], 128
    $region141: #{tpu_custom_call.1} parent=1 // pred_fallthru
      _
    %1071 = vsyncpa [#allocation3], 1
    %1072 = vsyncpa [#allocation6], 1
    %1073 = vsyncpa [#allocation9], 1
    %1074 = vsyncpa [#allocation12], 1
    %1075 = vsyncpa [#allocation15], 1
    %1076 = vsyncpa [#allocation4], 1
    %1077 = vsyncpa [#allocation19], 1

</llo_original>
